<compile_context>
chip_gen: v6e
topology: v6e:2x2x1
jax: 0.10.0
libtpu: 0.0.40
codegen_flags: <defaults>
</compile_context>

<pallas_src>
import jax
import jax.numpy as jnp
from jax.experimental import pallas as pl
from jax.experimental.pallas import tpu as pltpu


def _bigru_kernel(x_ref,                      # (T*Bp, Din)  time-major rows, bf16
                  wemb_ref, bemb_ref,         # (Din, E) bf16, (1, E) f32
                  wih_f_ref, bih_f_ref,       # (E, 3H) bf16, (1, 3H) f32
                  wih_b_ref, bih_b_ref,       # (E, 3H) bf16, (1, 3H) f32
                  whh_blk_ref, bhh_cat_ref,   # (2H, 6H) bf16 block-diagonal, (1, 6H) f32
                  wout_ref, bout_ref,         # (2H, C) f32, (1, C) f32
                  out_ref,                    # (Bp, C) f32
                  gi_f_scr, gi_b_scr):        # (T*Bp, 3H) f32 VMEM scratch each
    rows, _ = x_ref.shape
    Bp = out_ref.shape[0]
    T = rows // Bp
    H3 = wih_f_ref.shape[1]
    H = H3 // 3

    # ---------------- Phase 1: hoisted input-side matmuls (M = T*Bp) ------------------
    # All x-dependent gate pre-activations (embedding + W_ih for both directions) are
    # computed as large GEMMs once, with input biases folded in, then stored to scratch.
    e2d = (jnp.dot(x_ref[...], wemb_ref[...], preferred_element_type=jnp.float32)
           + bemb_ref[...])
    e2d_b = e2d.astype(wih_f_ref.dtype)                       # bf16 operand for the MXU
    gi_f_scr[...] = (jnp.dot(e2d_b, wih_f_ref[...],
                             preferred_element_type=jnp.float32) + bih_f_ref[...])
    gi_b_scr[...] = (jnp.dot(e2d_b, wih_b_ref[...],
                             preferred_element_type=jnp.float32) + bih_b_ref[...])

    # ---------------- Phase 2: serial bidirectional recurrence ------------------------
    # Weight / bias loads and broadcasts are hoisted above the loop (no per-iter
    # broadcast_in_dim re-emission).
    whh_blk = whh_blk_ref[...]                                # (2H, 6H) block-diagonal
    bhh = jnp.broadcast_to(bhh_cat_ref[...], (Bp, 2 * H3))    # (Bp, 6H)

    def cell(gi, gh, h):
        # PyTorch GRU gate order [r, z, n]; n uses r * (W_hn h + b_hn).
        r = jax.nn.sigmoid(gi[:, :H] + gh[:, :H])
        z = jax.nn.sigmoid(gi[:, H:2 * H] + gh[:, H:2 * H])
        n = jnp.tanh(gi[:, 2 * H:] + r * gh[:, 2 * H:])
        return (1.0 - z) * n + z * h

    def step(t, carry):
        h_cat, s_cat = carry                                  # (Bp, 2H) f32 each
        i_f = pl.multiple_of(t * Bp, 8)                       # sublane-aligned row start
        i_b = pl.multiple_of((T - 1 - t) * Bp, 8)
        gi_f = gi_f_scr[pl.ds(i_f, Bp), :]                    # fwd gates at time t
        gi_b = gi_b_scr[pl.ds(i_b, Bp), :]                    # bwd gates at time T-1-t
        # One fused block-diagonal recurrent matmul drives both directions per step.
        gh = jnp.dot(h_cat.astype(whh_blk.dtype), whh_blk,
                     preferred_element_type=jnp.float32) + bhh  # (Bp, 6H)
        h_f = cell(gi_f, gh[:, :H3], h_cat[:, :H])
        h_b = cell(gi_b, gh[:, H3:], h_cat[:, H:])
        h_cat = jnp.concatenate([h_f, h_b], axis=1)
        return h_cat, s_cat + h_cat

    zeros = jnp.zeros((Bp, 2 * H), jnp.float32)
    # Small static T -> fully unroll so fwd/bwd chains and epilogues overlap across steps.
    _, s_cat = jax.lax.fori_loop(0, T, step, (zeros, zeros), unroll=True)

    # ---------------- Phase 3: final linear on the time-summed state ------------------
    # sum_t (W h_t + b) == W (sum_t h_t) + T * b
    out_ref[...] = (jnp.dot(s_cat, wout_ref[...], preferred_element_type=jnp.float32)
                    + bout_ref[...] * jnp.float32(T))


def _round_up(n, m):
    return ((n + m - 1) // m) * m


@jax.jit
def bigru_forward(x, params):
    """x: (B, T, D_in) batch-first (PyTorch batch_first=True). Returns (B, n_classes)."""
    B, T, Din = x.shape
    H = params["w_hh_f_t"].shape[0]
    C = params["w_out_t"].shape[1]

    # Pad batch to a full f32 sublane multiple so every per-step tensor in the
    # recurrence uses full (8, 128) vregs instead of mostly-padding vregs at tiny B.
    Bp = max(8, _round_up(B, 8))
    x_p = jnp.pad(x, ((0, Bp - B), (0, 0), (0, 0)))
    # Time-major rows for the hoisted GEMMs and sublane-aligned per-step slicing in-kernel.
    x2d = jnp.transpose(x_p, (1, 0, 2)).reshape(T * Bp, Din).astype(jnp.bfloat16)

    # Fused block-diagonal recurrent weight: one MXU push per step covers fwd + bwd.
    whh_blk = jnp.zeros((2 * H, 6 * H), jnp.bfloat16)
    whh_blk = whh_blk.at[:H, :3 * H].set(params["w_hh_f_t"].astype(jnp.bfloat16))
    whh_blk = whh_blk.at[H:, 3 * H:].set(params["w_hh_b_t"].astype(jnp.bfloat16))
    bhh_cat = jnp.concatenate([params["b_hh_f"], params["b_hh_b"]], axis=1)

    args = (
        x2d,
        params["w_emb_t"].astype(jnp.bfloat16), params["b_emb"],
        params["w_ih_f_t"].astype(jnp.bfloat16), params["b_ih_f"],
        params["w_ih_b_t"].astype(jnp.bfloat16), params["b_ih_b"],
        whh_blk, bhh_cat,
        params["w_out_t"], params["b_out"],
    )

    vmem = pl.BlockSpec(memory_space=pltpu.MemorySpace.VMEM)
    out = pl.pallas_call(
        _bigru_kernel,
        out_shape=jax.ShapeDtypeStruct((Bp, C), jnp.float32),
        in_specs=[vmem] * len(args),
        out_specs=vmem,
        scratch_shapes=[pltpu.VMEM((T * Bp, 3 * H), jnp.float32),
                        pltpu.VMEM((T * Bp, 3 * H), jnp.float32)],
        compiler_params=pltpu.CompilerParams(vmem_limit_bytes=32 * 1024 * 1024),
    )(*args)
    return out[:B]


def init_params(key, d_in, embed_dim, hid_dim, n_classes):
    ks = jax.random.split(key, 16)
    u = lambda k, shape, s: jax.random.uniform(k, shape, jnp.float32, -s, s)
    se = 1.0 / jnp.sqrt(d_in)
    sh = 1.0 / jnp.sqrt(hid_dim)
    so = 1.0 / jnp.sqrt(2 * hid_dim)
    return {
        # embedding net (modeled as dense D_in -> E), stored transposed (Din, E)
        "w_emb_t": u(ks[0], (d_in, embed_dim), se),
        "b_emb":   u(ks[1], (1, embed_dim), se),
        # forward-direction GRU (PyTorch layout (3H, E)/(3H, H), stored transposed)
        "w_ih_f_t": u(ks[2], (embed_dim, 3 * hid_dim), sh),
        "w_hh_f_t": u(ks[3], (hid_dim, 3 * hid_dim), sh),
        "b_ih_f":   u(ks[4], (1, 3 * hid_dim), sh),
        "b_hh_f":   u(ks[5], (1, 3 * hid_dim), sh),
        # backward-direction GRU
        "w_ih_b_t": u(ks[6], (embed_dim, 3 * hid_dim), sh),
        "w_hh_b_t": u(ks[7], (hid_dim, 3 * hid_dim), sh),
        "b_ih_b":   u(ks[8], (1, 3 * hid_dim), sh),
        "b_hh_b":   u(ks[9], (1, 3 * hid_dim), sh),
        # final linear (2H -> C), stored transposed
        "w_out_t": u(ks[10], (2 * hid_dim, n_classes), so),
        "b_out":   u(ks[11], (1, n_classes), so),
    }


def _reference_forward(x, params):
    """Pure-JAX reference mirroring the kernel's bf16 operand casts (f32 accumulation)."""
    B, T, Din = x.shape
    H = params["w_hh_f_t"].shape[0]
    f32, bf16 = jnp.float32, jnp.bfloat16
    xe = x.reshape(B * T, Din).astype(bf16)
    e = (jnp.dot(xe, params["w_emb_t"].astype(bf16), preferred_element_type=f32)
         + params["b_emb"]).astype(bf16)
    gi_f = (jnp.dot(e, params["w_ih_f_t"].astype(bf16), preferred_element_type=f32)
            + params["b_ih_f"]).reshape(B, T, 3 * H)
    gi_b = (jnp.dot(e, params["w_ih_b_t"].astype(bf16), preferred_element_type=f32)
            + params["b_ih_b"]).reshape(B, T, 3 * H)
    whh_f = params["w_hh_f_t"].astype(bf16)
    whh_b = params["w_hh_b_t"].astype(bf16)

    def cell(gi, gh, h):
        r = jax.nn.sigmoid(gi[:, :H] + gh[:, :H])
        z = jax.nn.sigmoid(gi[:, H:2 * H] + gh[:, H:2 * H])
        n = jnp.tanh(gi[:, 2 * H:] + r * gh[:, 2 * H:])
        return (1.0 - z) * n + z * h

    h_f = jnp.zeros((B, H), f32)
    h_b = jnp.zeros((B, H), f32)
    s_f = jnp.zeros((B, H), f32)
    s_b = jnp.zeros((B, H), f32)
    for t in range(T):
        gh_f = (jnp.dot(h_f.astype(bf16), whh_f, preferred_element_type=f32)
                + params["b_hh_f"])
        h_f = cell(gi_f[:, t], gh_f, h_f)
        s_f = s_f + h_f
        gh_b = (jnp.dot(h_b.astype(bf16), whh_b, preferred_element_type=f32)
                + params["b_hh_b"])
        h_b = cell(gi_b[:, T - 1 - t], gh_b, h_b)
        s_b = s_b + h_b
    s = jnp.concatenate([s_f, s_b], axis=1)
    return (jnp.dot(s, params["w_out_t"], preferred_element_type=f32)
            + params["b_out"] * float(T))


if __name__ == "__main__":
    B, T, D_IN, EMBED, HID, N_CLASSES = 2, 8, 16, 16, 32, 10

    key = jax.random.PRNGKey(0)
    k_x, k_p = jax.random.split(key)
    x = jax.random.normal(k_x, (B, T, D_IN), jnp.float32)
    params = init_params(k_p, D_IN, EMBED, HID, N_CLASSES)

    out = bigru_forward(x, params)
    jax.block_until_ready(out)
    assert out.shape == (B, N_CLASSES)

    ref = _reference_forward(x, params)
    assert jnp.allclose(out, ref, rtol=2e-2, atol=2e-2), "kernel/reference mismatch"
    print("KERNEL_OK")
</pallas_src>

<mosaic_0001>
module attributes {stable_mosaic.version = 11 : i64} {
  func.func @_bigru_kernel(%arg0: memref<64x16xbf16, #tpu.memory_space<vmem>>, %arg1: memref<16x16xbf16, #tpu.memory_space<vmem>>, %arg2: memref<1x16xf32, #tpu.memory_space<vmem>>, %arg3: memref<16x96xbf16, #tpu.memory_space<vmem>>, %arg4: memref<1x96xf32, #tpu.memory_space<vmem>>, %arg5: memref<16x96xbf16, #tpu.memory_space<vmem>>, %arg6: memref<1x96xf32, #tpu.memory_space<vmem>>, %arg7: memref<64x192xbf16, #tpu.memory_space<vmem>>, %arg8: memref<1x192xf32, #tpu.memory_space<vmem>>, %arg9: memref<64x10xf32, #tpu.memory_space<vmem>>, %arg10: memref<1x10xf32, #tpu.memory_space<vmem>>, %arg11: memref<8x10xf32, #tpu.memory_space<vmem>>, %arg12: memref<64x96xf32, #tpu.memory_space<vmem>>, %arg13: memref<64x96xf32, #tpu.memory_space<vmem>>) attributes {dimension_semantics = [], scalar_prefetch = 0 : i64, scratch_operands = 2 : i64, tpu.core_type = #tpu.core_type<tc>} {
    %c0 = arith.constant 0 : index
    %c0_0 = arith.constant 0 : index
    %0 = vector.load %arg0[%c0, %c0_0] : memref<64x16xbf16, #tpu.memory_space<vmem>>, vector<64x16xbf16>
    %c0_1 = arith.constant 0 : index
    %c0_2 = arith.constant 0 : index
    %1 = vector.load %arg1[%c0_1, %c0_2] : memref<16x16xbf16, #tpu.memory_space<vmem>>, vector<16x16xbf16>
    %cst = arith.constant dense<0.000000e+00> : vector<64x16xf32>
    %2 = tpu.matmul %0, %1, %cst {dimension_numbers = #tpu.dot_dimension_numbers<[1], [0], [0], [1], [0, 0, 1, 1], [], []>} : vector<64x16xbf16>, vector<16x16xbf16>, vector<64x16xf32> -> vector<64x16xf32>
    %c0_3 = arith.constant 0 : index
    %c0_4 = arith.constant 0 : index
    %3 = vector.load %arg2[%c0_3, %c0_4] : memref<1x16xf32, #tpu.memory_space<vmem>>, vector<1x16xf32>
    %4 = vector.broadcast %3 : vector<1x16xf32> to vector<64x16xf32>
    %5 = arith.addf %2, %4 : vector<64x16xf32>
    %6 = arith.truncf %5 : vector<64x16xf32> to vector<64x16xbf16>
    %c0_5 = arith.constant 0 : index
    %c0_6 = arith.constant 0 : index
    %7 = vector.load %arg3[%c0_5, %c0_6] : memref<16x96xbf16, #tpu.memory_space<vmem>>, vector<16x96xbf16>
    %cst_7 = arith.constant dense<0.000000e+00> : vector<64x96xf32>
    %8 = tpu.matmul %6, %7, %cst_7 {dimension_numbers = #tpu.dot_dimension_numbers<[1], [0], [0], [1], [0, 0, 1, 1], [], []>} : vector<64x16xbf16>, vector<16x96xbf16>, vector<64x96xf32> -> vector<64x96xf32>
    %c0_8 = arith.constant 0 : index
    %c0_9 = arith.constant 0 : index
    %9 = vector.load %arg4[%c0_8, %c0_9] : memref<1x96xf32, #tpu.memory_space<vmem>>, vector<1x96xf32>
    %10 = vector.broadcast %9 : vector<1x96xf32> to vector<64x96xf32>
    %11 = arith.addf %8, %10 : vector<64x96xf32>
    %c0_10 = arith.constant 0 : index
    %c0_11 = arith.constant 0 : index
    %12 = vector.load %arg12[%c0_10, %c0_11] : memref<64x96xf32, #tpu.memory_space<vmem>>, vector<64x96xf32>
    tpu.vector_store %arg12[%c0_10, %c0_11], %11 {strides = array<i32>} : memref<64x96xf32, #tpu.memory_space<vmem>>, vector<64x96xf32>,
    %c0_12 = arith.constant 0 : index
    %c0_13 = arith.constant 0 : index
    %13 = vector.load %arg5[%c0_12, %c0_13] : memref<16x96xbf16, #tpu.memory_space<vmem>>, vector<16x96xbf16>
    %cst_14 = arith.constant dense<0.000000e+00> : vector<64x96xf32>
    %14 = tpu.matmul %6, %13, %cst_14 {dimension_numbers = #tpu.dot_dimension_numbers<[1], [0], [0], [1], [0, 0, 1, 1], [], []>} : vector<64x16xbf16>, vector<16x96xbf16>, vector<64x96xf32> -> vector<64x96xf32>
    %c0_15 = arith.constant 0 : index
    %c0_16 = arith.constant 0 : index
    %15 = vector.load %arg6[%c0_15, %c0_16] : memref<1x96xf32, #tpu.memory_space<vmem>>, vector<1x96xf32>
    %16 = vector.broadcast %15 : vector<1x96xf32> to vector<64x96xf32>
    %17 = arith.addf %14, %16 : vector<64x96xf32>
    %c0_17 = arith.constant 0 : index
    %c0_18 = arith.constant 0 : index
    %18 = vector.load %arg13[%c0_17, %c0_18] : memref<64x96xf32, #tpu.memory_space<vmem>>, vector<64x96xf32>
    tpu.vector_store %arg13[%c0_17, %c0_18], %17 {strides = array<i32>} : memref<64x96xf32, #tpu.memory_space<vmem>>, vector<64x96xf32>,
    %c0_19 = arith.constant 0 : index
    %c0_20 = arith.constant 0 : index
    %19 = vector.load %arg7[%c0_19, %c0_20] : memref<64x192xbf16, #tpu.memory_space<vmem>>, vector<64x192xbf16>
    %c0_21 = arith.constant 0 : index
    %c0_22 = arith.constant 0 : index
    %20 = vector.load %arg8[%c0_21, %c0_22] : memref<1x192xf32, #tpu.memory_space<vmem>>, vector<1x192xf32>
    %21 = vector.shape_cast %20 : vector<1x192xf32> to vector<1x192xf32>
    %22 = vector.broadcast %21 : vector<1x192xf32> to vector<8x192xf32>
    %cst_23 = arith.constant 0.000000e+00 : f32
    %23 = vector.broadcast %cst_23 : f32 to vector<8x64xf32>
    %c0_i32 = arith.constant 0 : i32
    %c8_i32 = arith.constant 8 : i32
    %24 = arith.muli %c0_i32, %c8_i32 : i32
    %25 = tpu.assume_multiple %24, 8 : i32
    %c7_i32 = arith.constant 7 : i32
    %26 = arith.subi %c7_i32, %c0_i32 : i32
    %c8_i32_24 = arith.constant 8 : i32
    %27 = arith.muli %26, %c8_i32_24 : i32
    %28 = tpu.assume_multiple %27, 8 : i32
    %29 = arith.index_cast %25 : i32 to index
    %c0_25 = arith.constant 0 : index
    %30 = vector.load %arg12[%29, %c0_25] : memref<64x96xf32, #tpu.memory_space<vmem>>, vector<8x96xf32>
    %31 = arith.index_cast %28 : i32 to index
    %c0_26 = arith.constant 0 : index
    %32 = vector.load %arg13[%31, %c0_26] : memref<64x96xf32, #tpu.memory_space<vmem>>, vector<8x96xf32>
    %33 = arith.truncf %23 : vector<8x64xf32> to vector<8x64xbf16>
    %cst_27 = arith.constant dense<0.000000e+00> : vector<8x192xf32>
    %34 = tpu.matmul %33, %19, %cst_27 {dimension_numbers = #tpu.dot_dimension_numbers<[1], [0], [0], [1], [0, 0, 1, 1], [], []>} : vector<8x64xbf16>, vector<64x192xbf16>, vector<8x192xf32> -> vector<8x192xf32>
    %35 = arith.addf %34, %22 : vector<8x192xf32>
    %36 = vector.extract_strided_slice %35 {offsets = [0, 0], sizes = [8, 96], strides = [1, 1]} : vector<8x192xf32> to vector<8x96xf32>
    %37 = vector.extract_strided_slice %23 {offsets = [0, 0], sizes = [8, 32], strides = [1, 1]} : vector<8x64xf32> to vector<8x32xf32>
    %38 = vector.extract_strided_slice %30 {offsets = [0, 0], sizes = [8, 32], strides = [1, 1]} : vector<8x96xf32> to vector<8x32xf32>
    %39 = vector.extract_strided_slice %36 {offsets = [0, 0], sizes = [8, 32], strides = [1, 1]} : vector<8x96xf32> to vector<8x32xf32>
    %40 = arith.addf %38, %39 : vector<8x32xf32>
    %41 = arith.negf %40 : vector<8x32xf32>
    %42 = math.exp %41 : vector<8x32xf32>
    %cst_28 = arith.constant 1.000000e+00 : f32
    %43 = vector.broadcast %cst_28 : f32 to vector<8x32xf32>
    %44 = arith.addf %43, %42 : vector<8x32xf32>
    %45 = arith.divf %43, %44 : vector<8x32xf32>
    %46 = vector.extract_strided_slice %30 {offsets = [0, 32], sizes = [8, 32], strides = [1, 1]} : vector<8x96xf32> to vector<8x32xf32>
    %47 = vector.extract_strided_slice %36 {offsets = [0, 32], sizes = [8, 32], strides = [1, 1]} : vector<8x96xf32> to vector<8x32xf32>
    %48 = arith.addf %46, %47 : vector<8x32xf32>
    %49 = arith.negf %48 : vector<8x32xf32>
    %50 = math.exp %49 : vector<8x32xf32>
    %cst_29 = arith.constant 1.000000e+00 : f32
    %51 = vector.broadcast %cst_29 : f32 to vector<8x32xf32>
    %52 = arith.addf %51, %50 : vector<8x32xf32>
    %53 = arith.divf %51, %52 : vector<8x32xf32>
    %54 = vector.extract_strided_slice %30 {offsets = [0, 64], sizes = [8, 32], strides = [1, 1]} : vector<8x96xf32> to vector<8x32xf32>
    %55 = vector.extract_strided_slice %36 {offsets = [0, 64], sizes = [8, 32], strides = [1, 1]} : vector<8x96xf32> to vector<8x32xf32>
    %56 = arith.mulf %45, %55 : vector<8x32xf32>
    %57 = arith.addf %54, %56 : vector<8x32xf32>
    %58 = math.tanh %57 : vector<8x32xf32>
    %cst_30 = arith.constant 1.000000e+00 : f32
    %59 = vector.broadcast %cst_30 : f32 to vector<8x32xf32>
    %60 = arith.subf %59, %53 : vector<8x32xf32>
    %61 = arith.mulf %60, %58 : vector<8x32xf32>
    %62 = arith.mulf %53, %37 : vector<8x32xf32>
    %63 = arith.addf %61, %62 : vector<8x32xf32>
    %64 = vector.extract_strided_slice %35 {offsets = [0, 96], sizes = [8, 96], strides = [1, 1]} : vector<8x192xf32> to vector<8x96xf32>
    %65 = vector.extract_strided_slice %23 {offsets = [0, 32], sizes = [8, 32], strides = [1, 1]} : vector<8x64xf32> to vector<8x32xf32>
    %66 = vector.extract_strided_slice %32 {offsets = [0, 0], sizes = [8, 32], strides = [1, 1]} : vector<8x96xf32> to vector<8x32xf32>
    %67 = vector.extract_strided_slice %64 {offsets = [0, 0], sizes = [8, 32], strides = [1, 1]} : vector<8x96xf32> to vector<8x32xf32>
    %68 = arith.addf %66, %67 : vector<8x32xf32>
    %69 = arith.negf %68 : vector<8x32xf32>
    %70 = math.exp %69 : vector<8x32xf32>
    %cst_31 = arith.constant 1.000000e+00 : f32
    %71 = vector.broadcast %cst_31 : f32 to vector<8x32xf32>
    %72 = arith.addf %71, %70 : vector<8x32xf32>
    %73 = arith.divf %71, %72 : vector<8x32xf32>
    %74 = vector.extract_strided_slice %32 {offsets = [0, 32], sizes = [8, 32], strides = [1, 1]} : vector<8x96xf32> to vector<8x32xf32>
    %75 = vector.extract_strided_slice %64 {offsets = [0, 32], sizes = [8, 32], strides = [1, 1]} : vector<8x96xf32> to vector<8x32xf32>
    %76 = arith.addf %74, %75 : vector<8x32xf32>
    %77 = arith.negf %76 : vector<8x32xf32>
    %78 = math.exp %77 : vector<8x32xf32>
    %cst_32 = arith.constant 1.000000e+00 : f32
    %79 = vector.broadcast %cst_32 : f32 to vector<8x32xf32>
    %80 = arith.addf %79, %78 : vector<8x32xf32>
    %81 = arith.divf %79, %80 : vector<8x32xf32>
    %82 = vector.extract_strided_slice %32 {offsets = [0, 64], sizes = [8, 32], strides = [1, 1]} : vector<8x96xf32> to vector<8x32xf32>
    %83 = vector.extract_strided_slice %64 {offsets = [0, 64], sizes = [8, 32], strides = [1, 1]} : vector<8x96xf32> to vector<8x32xf32>
    %84 = arith.mulf %73, %83 : vector<8x32xf32>
    %85 = arith.addf %82, %84 : vector<8x32xf32>
    %86 = math.tanh %85 : vector<8x32xf32>
    %cst_33 = arith.constant 1.000000e+00 : f32
    %87 = vector.broadcast %cst_33 : f32 to vector<8x32xf32>
    %88 = arith.subf %87, %81 : vector<8x32xf32>
    %89 = arith.mulf %88, %86 : vector<8x32xf32>
    %90 = arith.mulf %81, %65 : vector<8x32xf32>
    %91 = arith.addf %89, %90 : vector<8x32xf32>
    %92 = tpu.concatenate %63, %91 in 1 : vector<8x32xf32>, vector<8x32xf32> -> vector<8x64xf32>
    %93 = arith.addf %23, %92 : vector<8x64xf32>
    %c1_i32 = arith.constant 1 : i32
    %c8_i32_34 = arith.constant 8 : i32
    %94 = arith.muli %c1_i32, %c8_i32_34 : i32
    %95 = tpu.assume_multiple %94, 8 : i32
    %c7_i32_35 = arith.constant 7 : i32
    %96 = arith.subi %c7_i32_35, %c1_i32 : i32
    %c8_i32_36 = arith.constant 8 : i32
    %97 = arith.muli %96, %c8_i32_36 : i32
    %98 = tpu.assume_multiple %97, 8 : i32
    %99 = arith.index_cast %95 : i32 to index
    %c0_37 = arith.constant 0 : index
    %100 = vector.load %arg12[%99, %c0_37] : memref<64x96xf32, #tpu.memory_space<vmem>>, vector<8x96xf32>
    %101 = arith.index_cast %98 : i32 to index
    %c0_38 = arith.constant 0 : index
    %102 = vector.load %arg13[%101, %c0_38] : memref<64x96xf32, #tpu.memory_space<vmem>>, vector<8x96xf32>
    %103 = arith.truncf %92 : vector<8x64xf32> to vector<8x64xbf16>
    %cst_39 = arith.constant dense<0.000000e+00> : vector<8x192xf32>
    %104 = tpu.matmul %103, %19, %cst_39 {dimension_numbers = #tpu.dot_dimension_numbers<[1], [0], [0], [1], [0, 0, 1, 1], [], []>} : vector<8x64xbf16>, vector<64x192xbf16>, vector<8x192xf32> -> vector<8x192xf32>
    %105 = arith.addf %104, %22 : vector<8x192xf32>
    %106 = vector.extract_strided_slice %105 {offsets = [0, 0], sizes = [8, 96], strides = [1, 1]} : vector<8x192xf32> to vector<8x96xf32>
    %107 = vector.extract_strided_slice %92 {offsets = [0, 0], sizes = [8, 32], strides = [1, 1]} : vector<8x64xf32> to vector<8x32xf32>
    %108 = vector.extract_strided_slice %100 {offsets = [0, 0], sizes = [8, 32], strides = [1, 1]} : vector<8x96xf32> to vector<8x32xf32>
    %109 = vector.extract_strided_slice %106 {offsets = [0, 0], sizes = [8, 32], strides = [1, 1]} : vector<8x96xf32> to vector<8x32xf32>
    %110 = arith.addf %108, %109 : vector<8x32xf32>
    %111 = arith.negf %110 : vector<8x32xf32>
    %112 = math.exp %111 : vector<8x32xf32>
    %cst_40 = arith.constant 1.000000e+00 : f32
    %113 = vector.broadcast %cst_40 : f32 to vector<8x32xf32>
    %114 = arith.addf %113, %112 : vector<8x32xf32>
    %115 = arith.divf %113, %114 : vector<8x32xf32>
    %116 = vector.extract_strided_slice %100 {offsets = [0, 32], sizes = [8, 32], strides = [1, 1]} : vector<8x96xf32> to vector<8x32xf32>
    %117 = vector.extract_strided_slice %106 {offsets = [0, 32], sizes = [8, 32], strides = [1, 1]} : vector<8x96xf32> to vector<8x32xf32>
    %118 = arith.addf %116, %117 : vector<8x32xf32>
    %119 = arith.negf %118 : vector<8x32xf32>
    %120 = math.exp %119 : vector<8x32xf32>
    %cst_41 = arith.constant 1.000000e+00 : f32
    %121 = vector.broadcast %cst_41 : f32 to vector<8x32xf32>
    %122 = arith.addf %121, %120 : vector<8x32xf32>
    %123 = arith.divf %121, %122 : vector<8x32xf32>
    %124 = vector.extract_strided_slice %100 {offsets = [0, 64], sizes = [8, 32], strides = [1, 1]} : vector<8x96xf32> to vector<8x32xf32>
    %125 = vector.extract_strided_slice %106 {offsets = [0, 64], sizes = [8, 32], strides = [1, 1]} : vector<8x96xf32> to vector<8x32xf32>
    %126 = arith.mulf %115, %125 : vector<8x32xf32>
    %127 = arith.addf %124, %126 : vector<8x32xf32>
    %128 = math.tanh %127 : vector<8x32xf32>
    %cst_42 = arith.constant 1.000000e+00 : f32
    %129 = vector.broadcast %cst_42 : f32 to vector<8x32xf32>
    %130 = arith.subf %129, %123 : vector<8x32xf32>
    %131 = arith.mulf %130, %128 : vector<8x32xf32>
    %132 = arith.mulf %123, %107 : vector<8x32xf32>
    %133 = arith.addf %131, %132 : vector<8x32xf32>
    %134 = vector.extract_strided_slice %105 {offsets = [0, 96], sizes = [8, 96], strides = [1, 1]} : vector<8x192xf32> to vector<8x96xf32>
    %135 = vector.extract_strided_slice %92 {offsets = [0, 32], sizes = [8, 32], strides = [1, 1]} : vector<8x64xf32> to vector<8x32xf32>
    %136 = vector.extract_strided_slice %102 {offsets = [0, 0], sizes = [8, 32], strides = [1, 1]} : vector<8x96xf32> to vector<8x32xf32>
    %137 = vector.extract_strided_slice %134 {offsets = [0, 0], sizes = [8, 32], strides = [1, 1]} : vector<8x96xf32> to vector<8x32xf32>
    %138 = arith.addf %136, %137 : vector<8x32xf32>
    %139 = arith.negf %138 : vector<8x32xf32>
    %140 = math.exp %139 : vector<8x32xf32>
    %cst_43 = arith.constant 1.000000e+00 : f32
    %141 = vector.broadcast %cst_43 : f32 to vector<8x32xf32>
    %142 = arith.addf %141, %140 : vector<8x32xf32>
    %143 = arith.divf %141, %142 : vector<8x32xf32>
    %144 = vector.extract_strided_slice %102 {offsets = [0, 32], sizes = [8, 32], strides = [1, 1]} : vector<8x96xf32> to vector<8x32xf32>
    %145 = vector.extract_strided_slice %134 {offsets = [0, 32], sizes = [8, 32], strides = [1, 1]} : vector<8x96xf32> to vector<8x32xf32>
    %146 = arith.addf %144, %145 : vector<8x32xf32>
    %147 = arith.negf %146 : vector<8x32xf32>
    %148 = math.exp %147 : vector<8x32xf32>
    %cst_44 = arith.constant 1.000000e+00 : f32
    %149 = vector.broadcast %cst_44 : f32 to vector<8x32xf32>
    %150 = arith.addf %149, %148 : vector<8x32xf32>
    %151 = arith.divf %149, %150 : vector<8x32xf32>
    %152 = vector.extract_strided_slice %102 {offsets = [0, 64], sizes = [8, 32], strides = [1, 1]} : vector<8x96xf32> to vector<8x32xf32>
    %153 = vector.extract_strided_slice %134 {offsets = [0, 64], sizes = [8, 32], strides = [1, 1]} : vector<8x96xf32> to vector<8x32xf32>
    %154 = arith.mulf %143, %153 : vector<8x32xf32>
    %155 = arith.addf %152, %154 : vector<8x32xf32>
    %156 = math.tanh %155 : vector<8x32xf32>
    %cst_45 = arith.constant 1.000000e+00 : f32
    %157 = vector.broadcast %cst_45 : f32 to vector<8x32xf32>
    %158 = arith.subf %157, %151 : vector<8x32xf32>
    %159 = arith.mulf %158, %156 : vector<8x32xf32>
    %160 = arith.mulf %151, %135 : vector<8x32xf32>
    %161 = arith.addf %159, %160 : vector<8x32xf32>
    %162 = tpu.concatenate %133, %161 in 1 : vector<8x32xf32>, vector<8x32xf32> -> vector<8x64xf32>
    %163 = arith.addf %93, %162 : vector<8x64xf32>
    %c2_i32 = arith.constant 2 : i32
    %c8_i32_46 = arith.constant 8 : i32
    %164 = arith.muli %c2_i32, %c8_i32_46 : i32
    %165 = tpu.assume_multiple %164, 8 : i32
    %c7_i32_47 = arith.constant 7 : i32
    %166 = arith.subi %c7_i32_47, %c2_i32 : i32
    %c8_i32_48 = arith.constant 8 : i32
    %167 = arith.muli %166, %c8_i32_48 : i32
    %168 = tpu.assume_multiple %167, 8 : i32
    %169 = arith.index_cast %165 : i32 to index
    %c0_49 = arith.constant 0 : index
    %170 = vector.load %arg12[%169, %c0_49] : memref<64x96xf32, #tpu.memory_space<vmem>>, vector<8x96xf32>
    %171 = arith.index_cast %168 : i32 to index
    %c0_50 = arith.constant 0 : index
    %172 = vector.load %arg13[%171, %c0_50] : memref<64x96xf32, #tpu.memory_space<vmem>>, vector<8x96xf32>
    %173 = arith.truncf %162 : vector<8x64xf32> to vector<8x64xbf16>
    %cst_51 = arith.constant dense<0.000000e+00> : vector<8x192xf32>
    %174 = tpu.matmul %173, %19, %cst_51 {dimension_numbers = #tpu.dot_dimension_numbers<[1], [0], [0], [1], [0, 0, 1, 1], [], []>} : vector<8x64xbf16>, vector<64x192xbf16>, vector<8x192xf32> -> vector<8x192xf32>
    %175 = arith.addf %174, %22 : vector<8x192xf32>
    %176 = vector.extract_strided_slice %175 {offsets = [0, 0], sizes = [8, 96], strides = [1, 1]} : vector<8x192xf32> to vector<8x96xf32>
    %177 = vector.extract_strided_slice %162 {offsets = [0, 0], sizes = [8, 32], strides = [1, 1]} : vector<8x64xf32> to vector<8x32xf32>
    %178 = vector.extract_strided_slice %170 {offsets = [0, 0], sizes = [8, 32], strides = [1, 1]} : vector<8x96xf32> to vector<8x32xf32>
    %179 = vector.extract_strided_slice %176 {offsets = [0, 0], sizes = [8, 32], strides = [1, 1]} : vector<8x96xf32> to vector<8x32xf32>
    %180 = arith.addf %178, %179 : vector<8x32xf32>
    %181 = arith.negf %180 : vector<8x32xf32>
    %182 = math.exp %181 : vector<8x32xf32>
    %cst_52 = arith.constant 1.000000e+00 : f32
    %183 = vector.broadcast %cst_52 : f32 to vector<8x32xf32>
    %184 = arith.addf %183, %182 : vector<8x32xf32>
    %185 = arith.divf %183, %184 : vector<8x32xf32>
    %186 = vector.extract_strided_slice %170 {offsets = [0, 32], sizes = [8, 32], strides = [1, 1]} : vector<8x96xf32> to vector<8x32xf32>
    %187 = vector.extract_strided_slice %176 {offsets = [0, 32], sizes = [8, 32], strides = [1, 1]} : vector<8x96xf32> to vector<8x32xf32>
    %188 = arith.addf %186, %187 : vector<8x32xf32>
    %189 = arith.negf %188 : vector<8x32xf32>
    %190 = math.exp %189 : vector<8x32xf32>
    %cst_53 = arith.constant 1.000000e+00 : f32
    %191 = vector.broadcast %cst_53 : f32 to vector<8x32xf32>
    %192 = arith.addf %191, %190 : vector<8x32xf32>
    %193 = arith.divf %191, %192 : vector<8x32xf32>
    %194 = vector.extract_strided_slice %170 {offsets = [0, 64], sizes = [8, 32], strides = [1, 1]} : vector<8x96xf32> to vector<8x32xf32>
    %195 = vector.extract_strided_slice %176 {offsets = [0, 64], sizes = [8, 32], strides = [1, 1]} : vector<8x96xf32> to vector<8x32xf32>
    %196 = arith.mulf %185, %195 : vector<8x32xf32>
    %197 = arith.addf %194, %196 : vector<8x32xf32>
    %198 = math.tanh %197 : vector<8x32xf32>
    %cst_54 = arith.constant 1.000000e+00 : f32
    %199 = vector.broadcast %cst_54 : f32 to vector<8x32xf32>
    %200 = arith.subf %199, %193 : vector<8x32xf32>
    %201 = arith.mulf %200, %198 : vector<8x32xf32>
    %202 = arith.mulf %193, %177 : vector<8x32xf32>
    %203 = arith.addf %201, %202 : vector<8x32xf32>
    %204 = vector.extract_strided_slice %175 {offsets = [0, 96], sizes = [8, 96], strides = [1, 1]} : vector<8x192xf32> to vector<8x96xf32>
    %205 = vector.extract_strided_slice %162 {offsets = [0, 32], sizes = [8, 32], strides = [1, 1]} : vector<8x64xf32> to vector<8x32xf32>
    %206 = vector.extract_strided_slice %172 {offsets = [0, 0], sizes = [8, 32], strides = [1, 1]} : vector<8x96xf32> to vector<8x32xf32>
    %207 = vector.extract_strided_slice %204 {offsets = [0, 0], sizes = [8, 32], strides = [1, 1]} : vector<8x96xf32> to vector<8x32xf32>
    %208 = arith.addf %206, %207 : vector<8x32xf32>
    %209 = arith.negf %208 : vector<8x32xf32>
    %210 = math.exp %209 : vector<8x32xf32>
    %cst_55 = arith.constant 1.000000e+00 : f32
    %211 = vector.broadcast %cst_55 : f32 to vector<8x32xf32>
    %212 = arith.addf %211, %210 : vector<8x32xf32>
    %213 = arith.divf %211, %212 : vector<8x32xf32>
    %214 = vector.extract_strided_slice %172 {offsets = [0, 32], sizes = [8, 32], strides = [1, 1]} : vector<8x96xf32> to vector<8x32xf32>
    %215 = vector.extract_strided_slice %204 {offsets = [0, 32], sizes = [8, 32], strides = [1, 1]} : vector<8x96xf32> to vector<8x32xf32>
    %216 = arith.addf %214, %215 : vector<8x32xf32>
    %217 = arith.negf %216 : vector<8x32xf32>
    %218 = math.exp %217 : vector<8x32xf32>
    %cst_56 = arith.constant 1.000000e+00 : f32
    %219 = vector.broadcast %cst_56 : f32 to vector<8x32xf32>
    %220 = arith.addf %219, %218 : vector<8x32xf32>
    %221 = arith.divf %219, %220 : vector<8x32xf32>
    %222 = vector.extract_strided_slice %172 {offsets = [0, 64], sizes = [8, 32], strides = [1, 1]} : vector<8x96xf32> to vector<8x32xf32>
    %223 = vector.extract_strided_slice %204 {offsets = [0, 64], sizes = [8, 32], strides = [1, 1]} : vector<8x96xf32> to vector<8x32xf32>
    %224 = arith.mulf %213, %223 : vector<8x32xf32>
    %225 = arith.addf %222, %224 : vector<8x32xf32>
    %226 = math.tanh %225 : vector<8x32xf32>
    %cst_57 = arith.constant 1.000000e+00 : f32
    %227 = vector.broadcast %cst_57 : f32 to vector<8x32xf32>
    %228 = arith.subf %227, %221 : vector<8x32xf32>
    %229 = arith.mulf %228, %226 : vector<8x32xf32>
    %230 = arith.mulf %221, %205 : vector<8x32xf32>
    %231 = arith.addf %229, %230 : vector<8x32xf32>
    %232 = tpu.concatenate %203, %231 in 1 : vector<8x32xf32>, vector<8x32xf32> -> vector<8x64xf32>
    %233 = arith.addf %163, %232 : vector<8x64xf32>
    %c3_i32 = arith.constant 3 : i32
    %c8_i32_58 = arith.constant 8 : i32
    %234 = arith.muli %c3_i32, %c8_i32_58 : i32
    %235 = tpu.assume_multiple %234, 8 : i32
    %c7_i32_59 = arith.constant 7 : i32
    %236 = arith.subi %c7_i32_59, %c3_i32 : i32
    %c8_i32_60 = arith.constant 8 : i32
    %237 = arith.muli %236, %c8_i32_60 : i32
    %238 = tpu.assume_multiple %237, 8 : i32
    %239 = arith.index_cast %235 : i32 to index
    %c0_61 = arith.constant 0 : index
    %240 = vector.load %arg12[%239, %c0_61] : memref<64x96xf32, #tpu.memory_space<vmem>>, vector<8x96xf32>
    %241 = arith.index_cast %238 : i32 to index
    %c0_62 = arith.constant 0 : index
    %242 = vector.load %arg13[%241, %c0_62] : memref<64x96xf32, #tpu.memory_space<vmem>>, vector<8x96xf32>
    %243 = arith.truncf %232 : vector<8x64xf32> to vector<8x64xbf16>
    %cst_63 = arith.constant dense<0.000000e+00> : vector<8x192xf32>
    %244 = tpu.matmul %243, %19, %cst_63 {dimension_numbers = #tpu.dot_dimension_numbers<[1], [0], [0], [1], [0, 0, 1, 1], [], []>} : vector<8x64xbf16>, vector<64x192xbf16>, vector<8x192xf32> -> vector<8x192xf32>
    %245 = arith.addf %244, %22 : vector<8x192xf32>
    %246 = vector.extract_strided_slice %245 {offsets = [0, 0], sizes = [8, 96], strides = [1, 1]} : vector<8x192xf32> to vector<8x96xf32>
    %247 = vector.extract_strided_slice %232 {offsets = [0, 0], sizes = [8, 32], strides = [1, 1]} : vector<8x64xf32> to vector<8x32xf32>
    %248 = vector.extract_strided_slice %240 {offsets = [0, 0], sizes = [8, 32], strides = [1, 1]} : vector<8x96xf32> to vector<8x32xf32>
    %249 = vector.extract_strided_slice %246 {offsets = [0, 0], sizes = [8, 32], strides = [1, 1]} : vector<8x96xf32> to vector<8x32xf32>
    %250 = arith.addf %248, %249 : vector<8x32xf32>
    %251 = arith.negf %250 : vector<8x32xf32>
    %252 = math.exp %251 : vector<8x32xf32>
    %cst_64 = arith.constant 1.000000e+00 : f32
    %253 = vector.broadcast %cst_64 : f32 to vector<8x32xf32>
    %254 = arith.addf %253, %252 : vector<8x32xf32>
    %255 = arith.divf %253, %254 : vector<8x32xf32>
    %256 = vector.extract_strided_slice %240 {offsets = [0, 32], sizes = [8, 32], strides = [1, 1]} : vector<8x96xf32> to vector<8x32xf32>
    %257 = vector.extract_strided_slice %246 {offsets = [0, 32], sizes = [8, 32], strides = [1, 1]} : vector<8x96xf32> to vector<8x32xf32>
    %258 = arith.addf %256, %257 : vector<8x32xf32>
    %259 = arith.negf %258 : vector<8x32xf32>
    %260 = math.exp %259 : vector<8x32xf32>
    %cst_65 = arith.constant 1.000000e+00 : f32
    %261 = vector.broadcast %cst_65 : f32 to vector<8x32xf32>
    %262 = arith.addf %261, %260 : vector<8x32xf32>
    %263 = arith.divf %261, %262 : vector<8x32xf32>
    %264 = vector.extract_strided_slice %240 {offsets = [0, 64], sizes = [8, 32], strides = [1, 1]} : vector<8x96xf32> to vector<8x32xf32>
    %265 = vector.extract_strided_slice %246 {offsets = [0, 64], sizes = [8, 32], strides = [1, 1]} : vector<8x96xf32> to vector<8x32xf32>
    %266 = arith.mulf %255, %265 : vector<8x32xf32>
    %267 = arith.addf %264, %266 : vector<8x32xf32>
    %268 = math.tanh %267 : vector<8x32xf32>
    %cst_66 = arith.constant 1.000000e+00 : f32
    %269 = vector.broadcast %cst_66 : f32 to vector<8x32xf32>
    %270 = arith.subf %269, %263 : vector<8x32xf32>
    %271 = arith.mulf %270, %268 : vector<8x32xf32>
    %272 = arith.mulf %263, %247 : vector<8x32xf32>
    %273 = arith.addf %271, %272 : vector<8x32xf32>
    %274 = vector.extract_strided_slice %245 {offsets = [0, 96], sizes = [8, 96], strides = [1, 1]} : vector<8x192xf32> to vector<8x96xf32>
    %275 = vector.extract_strided_slice %232 {offsets = [0, 32], sizes = [8, 32], strides = [1, 1]} : vector<8x64xf32> to vector<8x32xf32>
    %276 = vector.extract_strided_slice %242 {offsets = [0, 0], sizes = [8, 32], strides = [1, 1]} : vector<8x96xf32> to vector<8x32xf32>
    %277 = vector.extract_strided_slice %274 {offsets = [0, 0], sizes = [8, 32], strides = [1, 1]} : vector<8x96xf32> to vector<8x32xf32>
    %278 = arith.addf %276, %277 : vector<8x32xf32>
    %279 = arith.negf %278 : vector<8x32xf32>
    %280 = math.exp %279 : vector<8x32xf32>
    %cst_67 = arith.constant 1.000000e+00 : f32
    %281 = vector.broadcast %cst_67 : f32 to vector<8x32xf32>
    %282 = arith.addf %281, %280 : vector<8x32xf32>
    %283 = arith.divf %281, %282 : vector<8x32xf32>
    %284 = vector.extract_strided_slice %242 {offsets = [0, 32], sizes = [8, 32], strides = [1, 1]} : vector<8x96xf32> to vector<8x32xf32>
    %285 = vector.extract_strided_slice %274 {offsets = [0, 32], sizes = [8, 32], strides = [1, 1]} : vector<8x96xf32> to vector<8x32xf32>
    %286 = arith.addf %284, %285 : vector<8x32xf32>
    %287 = arith.negf %286 : vector<8x32xf32>
    %288 = math.exp %287 : vector<8x32xf32>
    %cst_68 = arith.constant 1.000000e+00 : f32
    %289 = vector.broadcast %cst_68 : f32 to vector<8x32xf32>
    %290 = arith.addf %289, %288 : vector<8x32xf32>
    %291 = arith.divf %289, %290 : vector<8x32xf32>
    %292 = vector.extract_strided_slice %242 {offsets = [0, 64], sizes = [8, 32], strides = [1, 1]} : vector<8x96xf32> to vector<8x32xf32>
    %293 = vector.extract_strided_slice %274 {offsets = [0, 64], sizes = [8, 32], strides = [1, 1]} : vector<8x96xf32> to vector<8x32xf32>
    %294 = arith.mulf %283, %293 : vector<8x32xf32>
    %295 = arith.addf %292, %294 : vector<8x32xf32>
    %296 = math.tanh %295 : vector<8x32xf32>
    %cst_69 = arith.constant 1.000000e+00 : f32
    %297 = vector.broadcast %cst_69 : f32 to vector<8x32xf32>
    %298 = arith.subf %297, %291 : vector<8x32xf32>
    %299 = arith.mulf %298, %296 : vector<8x32xf32>
    %300 = arith.mulf %291, %275 : vector<8x32xf32>
    %301 = arith.addf %299, %300 : vector<8x32xf32>
    %302 = tpu.concatenate %273, %301 in 1 : vector<8x32xf32>, vector<8x32xf32> -> vector<8x64xf32>
    %303 = arith.addf %233, %302 : vector<8x64xf32>
    %c4_i32 = arith.constant 4 : i32
    %c8_i32_70 = arith.constant 8 : i32
    %304 = arith.muli %c4_i32, %c8_i32_70 : i32
    %305 = tpu.assume_multiple %304, 8 : i32
    %c7_i32_71 = arith.constant 7 : i32
    %306 = arith.subi %c7_i32_71, %c4_i32 : i32
    %c8_i32_72 = arith.constant 8 : i32
    %307 = arith.muli %306, %c8_i32_72 : i32
    %308 = tpu.assume_multiple %307, 8 : i32
    %309 = arith.index_cast %305 : i32 to index
    %c0_73 = arith.constant 0 : index
    %310 = vector.load %arg12[%309, %c0_73] : memref<64x96xf32, #tpu.memory_space<vmem>>, vector<8x96xf32>
    %311 = arith.index_cast %308 : i32 to index
    %c0_74 = arith.constant 0 : index
    %312 = vector.load %arg13[%311, %c0_74] : memref<64x96xf32, #tpu.memory_space<vmem>>, vector<8x96xf32>
    %313 = arith.truncf %302 : vector<8x64xf32> to vector<8x64xbf16>
    %cst_75 = arith.constant dense<0.000000e+00> : vector<8x192xf32>
    %314 = tpu.matmul %313, %19, %cst_75 {dimension_numbers = #tpu.dot_dimension_numbers<[1], [0], [0], [1], [0, 0, 1, 1], [], []>} : vector<8x64xbf16>, vector<64x192xbf16>, vector<8x192xf32> -> vector<8x192xf32>
    %315 = arith.addf %314, %22 : vector<8x192xf32>
    %316 = vector.extract_strided_slice %315 {offsets = [0, 0], sizes = [8, 96], strides = [1, 1]} : vector<8x192xf32> to vector<8x96xf32>
    %317 = vector.extract_strided_slice %302 {offsets = [0, 0], sizes = [8, 32], strides = [1, 1]} : vector<8x64xf32> to vector<8x32xf32>
    %318 = vector.extract_strided_slice %310 {offsets = [0, 0], sizes = [8, 32], strides = [1, 1]} : vector<8x96xf32> to vector<8x32xf32>
    %319 = vector.extract_strided_slice %316 {offsets = [0, 0], sizes = [8, 32], strides = [1, 1]} : vector<8x96xf32> to vector<8x32xf32>
    %320 = arith.addf %318, %319 : vector<8x32xf32>
    %321 = arith.negf %320 : vector<8x32xf32>
    %322 = math.exp %321 : vector<8x32xf32>
    %cst_76 = arith.constant 1.000000e+00 : f32
    %323 = vector.broadcast %cst_76 : f32 to vector<8x32xf32>
    %324 = arith.addf %323, %322 : vector<8x32xf32>
    %325 = arith.divf %323, %324 : vector<8x32xf32>
    %326 = vector.extract_strided_slice %310 {offsets = [0, 32], sizes = [8, 32], strides = [1, 1]} : vector<8x96xf32> to vector<8x32xf32>
    %327 = vector.extract_strided_slice %316 {offsets = [0, 32], sizes = [8, 32], strides = [1, 1]} : vector<8x96xf32> to vector<8x32xf32>
    %328 = arith.addf %326, %327 : vector<8x32xf32>
    %329 = arith.negf %328 : vector<8x32xf32>
    %330 = math.exp %329 : vector<8x32xf32>
    %cst_77 = arith.constant 1.000000e+00 : f32
    %331 = vector.broadcast %cst_77 : f32 to vector<8x32xf32>
    %332 = arith.addf %331, %330 : vector<8x32xf32>
    %333 = arith.divf %331, %332 : vector<8x32xf32>
    %334 = vector.extract_strided_slice %310 {offsets = [0, 64], sizes = [8, 32], strides = [1, 1]} : vector<8x96xf32> to vector<8x32xf32>
    %335 = vector.extract_strided_slice %316 {offsets = [0, 64], sizes = [8, 32], strides = [1, 1]} : vector<8x96xf32> to vector<8x32xf32>
    %336 = arith.mulf %325, %335 : vector<8x32xf32>
    %337 = arith.addf %334, %336 : vector<8x32xf32>
    %338 = math.tanh %337 : vector<8x32xf32>
    %cst_78 = arith.constant 1.000000e+00 : f32
    %339 = vector.broadcast %cst_78 : f32 to vector<8x32xf32>
    %340 = arith.subf %339, %333 : vector<8x32xf32>
    %341 = arith.mulf %340, %338 : vector<8x32xf32>
    %342 = arith.mulf %333, %317 : vector<8x32xf32>
    %343 = arith.addf %341, %342 : vector<8x32xf32>
    %344 = vector.extract_strided_slice %315 {offsets = [0, 96], sizes = [8, 96], strides = [1, 1]} : vector<8x192xf32> to vector<8x96xf32>
    %345 = vector.extract_strided_slice %302 {offsets = [0, 32], sizes = [8, 32], strides = [1, 1]} : vector<8x64xf32> to vector<8x32xf32>
    %346 = vector.extract_strided_slice %312 {offsets = [0, 0], sizes = [8, 32], strides = [1, 1]} : vector<8x96xf32> to vector<8x32xf32>
    %347 = vector.extract_strided_slice %344 {offsets = [0, 0], sizes = [8, 32], strides = [1, 1]} : vector<8x96xf32> to vector<8x32xf32>
    %348 = arith.addf %346, %347 : vector<8x32xf32>
    %349 = arith.negf %348 : vector<8x32xf32>
    %350 = math.exp %349 : vector<8x32xf32>
    %cst_79 = arith.constant 1.000000e+00 : f32
    %351 = vector.broadcast %cst_79 : f32 to vector<8x32xf32>
    %352 = arith.addf %351, %350 : vector<8x32xf32>
    %353 = arith.divf %351, %352 : vector<8x32xf32>
    %354 = vector.extract_strided_slice %312 {offsets = [0, 32], sizes = [8, 32], strides = [1, 1]} : vector<8x96xf32> to vector<8x32xf32>
    %355 = vector.extract_strided_slice %344 {offsets = [0, 32], sizes = [8, 32], strides = [1, 1]} : vector<8x96xf32> to vector<8x32xf32>
    %356 = arith.addf %354, %355 : vector<8x32xf32>
    %357 = arith.negf %356 : vector<8x32xf32>
    %358 = math.exp %357 : vector<8x32xf32>
    %cst_80 = arith.constant 1.000000e+00 : f32
    %359 = vector.broadcast %cst_80 : f32 to vector<8x32xf32>
    %360 = arith.addf %359, %358 : vector<8x32xf32>
    %361 = arith.divf %359, %360 : vector<8x32xf32>
    %362 = vector.extract_strided_slice %312 {offsets = [0, 64], sizes = [8, 32], strides = [1, 1]} : vector<8x96xf32> to vector<8x32xf32>
    %363 = vector.extract_strided_slice %344 {offsets = [0, 64], sizes = [8, 32], strides = [1, 1]} : vector<8x96xf32> to vector<8x32xf32>
    %364 = arith.mulf %353, %363 : vector<8x32xf32>
    %365 = arith.addf %362, %364 : vector<8x32xf32>
    %366 = math.tanh %365 : vector<8x32xf32>
    %cst_81 = arith.constant 1.000000e+00 : f32
    %367 = vector.broadcast %cst_81 : f32 to vector<8x32xf32>
    %368 = arith.subf %367, %361 : vector<8x32xf32>
    %369 = arith.mulf %368, %366 : vector<8x32xf32>
    %370 = arith.mulf %361, %345 : vector<8x32xf32>
    %371 = arith.addf %369, %370 : vector<8x32xf32>
    %372 = tpu.concatenate %343, %371 in 1 : vector<8x32xf32>, vector<8x32xf32> -> vector<8x64xf32>
    %373 = arith.addf %303, %372 : vector<8x64xf32>
    %c5_i32 = arith.constant 5 : i32
    %c8_i32_82 = arith.constant 8 : i32
    %374 = arith.muli %c5_i32, %c8_i32_82 : i32
    %375 = tpu.assume_multiple %374, 8 : i32
    %c7_i32_83 = arith.constant 7 : i32
    %376 = arith.subi %c7_i32_83, %c5_i32 : i32
    %c8_i32_84 = arith.constant 8 : i32
    %377 = arith.muli %376, %c8_i32_84 : i32
    %378 = tpu.assume_multiple %377, 8 : i32
    %379 = arith.index_cast %375 : i32 to index
    %c0_85 = arith.constant 0 : index
    %380 = vector.load %arg12[%379, %c0_85] : memref<64x96xf32, #tpu.memory_space<vmem>>, vector<8x96xf32>
    %381 = arith.index_cast %378 : i32 to index
    %c0_86 = arith.constant 0 : index
    %382 = vector.load %arg13[%381, %c0_86] : memref<64x96xf32, #tpu.memory_space<vmem>>, vector<8x96xf32>
    %383 = arith.truncf %372 : vector<8x64xf32> to vector<8x64xbf16>
    %cst_87 = arith.constant dense<0.000000e+00> : vector<8x192xf32>
    %384 = tpu.matmul %383, %19, %cst_87 {dimension_numbers = #tpu.dot_dimension_numbers<[1], [0], [0], [1], [0, 0, 1, 1], [], []>} : vector<8x64xbf16>, vector<64x192xbf16>, vector<8x192xf32> -> vector<8x192xf32>
    %385 = arith.addf %384, %22 : vector<8x192xf32>
    %386 = vector.extract_strided_slice %385 {offsets = [0, 0], sizes = [8, 96], strides = [1, 1]} : vector<8x192xf32> to vector<8x96xf32>
    %387 = vector.extract_strided_slice %372 {offsets = [0, 0], sizes = [8, 32], strides = [1, 1]} : vector<8x64xf32> to vector<8x32xf32>
    %388 = vector.extract_strided_slice %380 {offsets = [0, 0], sizes = [8, 32], strides = [1, 1]} : vector<8x96xf32> to vector<8x32xf32>
    %389 = vector.extract_strided_slice %386 {offsets = [0, 0], sizes = [8, 32], strides = [1, 1]} : vector<8x96xf32> to vector<8x32xf32>
    %390 = arith.addf %388, %389 : vector<8x32xf32>
    %391 = arith.negf %390 : vector<8x32xf32>
    %392 = math.exp %391 : vector<8x32xf32>
    %cst_88 = arith.constant 1.000000e+00 : f32
    %393 = vector.broadcast %cst_88 : f32 to vector<8x32xf32>
    %394 = arith.addf %393, %392 : vector<8x32xf32>
    %395 = arith.divf %393, %394 : vector<8x32xf32>
    %396 = vector.extract_strided_slice %380 {offsets = [0, 32], sizes = [8, 32], strides = [1, 1]} : vector<8x96xf32> to vector<8x32xf32>
    %397 = vector.extract_strided_slice %386 {offsets = [0, 32], sizes = [8, 32], strides = [1, 1]} : vector<8x96xf32> to vector<8x32xf32>
    %398 = arith.addf %396, %397 : vector<8x32xf32>
    %399 = arith.negf %398 : vector<8x32xf32>
    %400 = math.exp %399 : vector<8x32xf32>
    %cst_89 = arith.constant 1.000000e+00 : f32
    %401 = vector.broadcast %cst_89 : f32 to vector<8x32xf32>
    %402 = arith.addf %401, %400 : vector<8x32xf32>
    %403 = arith.divf %401, %402 : vector<8x32xf32>
    %404 = vector.extract_strided_slice %380 {offsets = [0, 64], sizes = [8, 32], strides = [1, 1]} : vector<8x96xf32> to vector<8x32xf32>
    %405 = vector.extract_strided_slice %386 {offsets = [0, 64], sizes = [8, 32], strides = [1, 1]} : vector<8x96xf32> to vector<8x32xf32>
    %406 = arith.mulf %395, %405 : vector<8x32xf32>
    %407 = arith.addf %404, %406 : vector<8x32xf32>
    %408 = math.tanh %407 : vector<8x32xf32>
    %cst_90 = arith.constant 1.000000e+00 : f32
    %409 = vector.broadcast %cst_90 : f32 to vector<8x32xf32>
    %410 = arith.subf %409, %403 : vector<8x32xf32>
    %411 = arith.mulf %410, %408 : vector<8x32xf32>
    %412 = arith.mulf %403, %387 : vector<8x32xf32>
    %413 = arith.addf %411, %412 : vector<8x32xf32>
    %414 = vector.extract_strided_slice %385 {offsets = [0, 96], sizes = [8, 96], strides = [1, 1]} : vector<8x192xf32> to vector<8x96xf32>
    %415 = vector.extract_strided_slice %372 {offsets = [0, 32], sizes = [8, 32], strides = [1, 1]} : vector<8x64xf32> to vector<8x32xf32>
    %416 = vector.extract_strided_slice %382 {offsets = [0, 0], sizes = [8, 32], strides = [1, 1]} : vector<8x96xf32> to vector<8x32xf32>
    %417 = vector.extract_strided_slice %414 {offsets = [0, 0], sizes = [8, 32], strides = [1, 1]} : vector<8x96xf32> to vector<8x32xf32>
    %418 = arith.addf %416, %417 : vector<8x32xf32>
    %419 = arith.negf %418 : vector<8x32xf32>
    %420 = math.exp %419 : vector<8x32xf32>
    %cst_91 = arith.constant 1.000000e+00 : f32
    %421 = vector.broadcast %cst_91 : f32 to vector<8x32xf32>
    %422 = arith.addf %421, %420 : vector<8x32xf32>
    %423 = arith.divf %421, %422 : vector<8x32xf32>
    %424 = vector.extract_strided_slice %382 {offsets = [0, 32], sizes = [8, 32], strides = [1, 1]} : vector<8x96xf32> to vector<8x32xf32>
    %425 = vector.extract_strided_slice %414 {offsets = [0, 32], sizes = [8, 32], strides = [1, 1]} : vector<8x96xf32> to vector<8x32xf32>
    %426 = arith.addf %424, %425 : vector<8x32xf32>
    %427 = arith.negf %426 : vector<8x32xf32>
    %428 = math.exp %427 : vector<8x32xf32>
    %cst_92 = arith.constant 1.000000e+00 : f32
    %429 = vector.broadcast %cst_92 : f32 to vector<8x32xf32>
    %430 = arith.addf %429, %428 : vector<8x32xf32>
    %431 = arith.divf %429, %430 : vector<8x32xf32>
    %432 = vector.extract_strided_slice %382 {offsets = [0, 64], sizes = [8, 32], strides = [1, 1]} : vector<8x96xf32> to vector<8x32xf32>
    %433 = vector.extract_strided_slice %414 {offsets = [0, 64], sizes = [8, 32], strides = [1, 1]} : vector<8x96xf32> to vector<8x32xf32>
    %434 = arith.mulf %423, %433 : vector<8x32xf32>
    %435 = arith.addf %432, %434 : vector<8x32xf32>
    %436 = math.tanh %435 : vector<8x32xf32>
    %cst_93 = arith.constant 1.000000e+00 : f32
    %437 = vector.broadcast %cst_93 : f32 to vector<8x32xf32>
    %438 = arith.subf %437, %431 : vector<8x32xf32>
    %439 = arith.mulf %438, %436 : vector<8x32xf32>
    %440 = arith.mulf %431, %415 : vector<8x32xf32>
    %441 = arith.addf %439, %440 : vector<8x32xf32>
    %442 = tpu.concatenate %413, %441 in 1 : vector<8x32xf32>, vector<8x32xf32> -> vector<8x64xf32>
    %443 = arith.addf %373, %442 : vector<8x64xf32>
    %c6_i32 = arith.constant 6 : i32
    %c8_i32_94 = arith.constant 8 : i32
    %444 = arith.muli %c6_i32, %c8_i32_94 : i32
    %445 = tpu.assume_multiple %444, 8 : i32
    %c7_i32_95 = arith.constant 7 : i32
    %446 = arith.subi %c7_i32_95, %c6_i32 : i32
    %c8_i32_96 = arith.constant 8 : i32
    %447 = arith.muli %446, %c8_i32_96 : i32
    %448 = tpu.assume_multiple %447, 8 : i32
    %449 = arith.index_cast %445 : i32 to index
    %c0_97 = arith.constant 0 : index
    %450 = vector.load %arg12[%449, %c0_97] : memref<64x96xf32, #tpu.memory_space<vmem>>, vector<8x96xf32>
    %451 = arith.index_cast %448 : i32 to index
    %c0_98 = arith.constant 0 : index
    %452 = vector.load %arg13[%451, %c0_98] : memref<64x96xf32, #tpu.memory_space<vmem>>, vector<8x96xf32>
    %453 = arith.truncf %442 : vector<8x64xf32> to vector<8x64xbf16>
    %cst_99 = arith.constant dense<0.000000e+00> : vector<8x192xf32>
    %454 = tpu.matmul %453, %19, %cst_99 {dimension_numbers = #tpu.dot_dimension_numbers<[1], [0], [0], [1], [0, 0, 1, 1], [], []>} : vector<8x64xbf16>, vector<64x192xbf16>, vector<8x192xf32> -> vector<8x192xf32>
    %455 = arith.addf %454, %22 : vector<8x192xf32>
    %456 = vector.extract_strided_slice %455 {offsets = [0, 0], sizes = [8, 96], strides = [1, 1]} : vector<8x192xf32> to vector<8x96xf32>
    %457 = vector.extract_strided_slice %442 {offsets = [0, 0], sizes = [8, 32], strides = [1, 1]} : vector<8x64xf32> to vector<8x32xf32>
    %458 = vector.extract_strided_slice %450 {offsets = [0, 0], sizes = [8, 32], strides = [1, 1]} : vector<8x96xf32> to vector<8x32xf32>
    %459 = vector.extract_strided_slice %456 {offsets = [0, 0], sizes = [8, 32], strides = [1, 1]} : vector<8x96xf32> to vector<8x32xf32>
    %460 = arith.addf %458, %459 : vector<8x32xf32>
    %461 = arith.negf %460 : vector<8x32xf32>
    %462 = math.exp %461 : vector<8x32xf32>
    %cst_100 = arith.constant 1.000000e+00 : f32
    %463 = vector.broadcast %cst_100 : f32 to vector<8x32xf32>
    %464 = arith.addf %463, %462 : vector<8x32xf32>
    %465 = arith.divf %463, %464 : vector<8x32xf32>
    %466 = vector.extract_strided_slice %450 {offsets = [0, 32], sizes = [8, 32], strides = [1, 1]} : vector<8x96xf32> to vector<8x32xf32>
    %467 = vector.extract_strided_slice %456 {offsets = [0, 32], sizes = [8, 32], strides = [1, 1]} : vector<8x96xf32> to vector<8x32xf32>
    %468 = arith.addf %466, %467 : vector<8x32xf32>
    %469 = arith.negf %468 : vector<8x32xf32>
    %470 = math.exp %469 : vector<8x32xf32>
    %cst_101 = arith.constant 1.000000e+00 : f32
    %471 = vector.broadcast %cst_101 : f32 to vector<8x32xf32>
    %472 = arith.addf %471, %470 : vector<8x32xf32>
    %473 = arith.divf %471, %472 : vector<8x32xf32>
    %474 = vector.extract_strided_slice %450 {offsets = [0, 64], sizes = [8, 32], strides = [1, 1]} : vector<8x96xf32> to vector<8x32xf32>
    %475 = vector.extract_strided_slice %456 {offsets = [0, 64], sizes = [8, 32], strides = [1, 1]} : vector<8x96xf32> to vector<8x32xf32>
    %476 = arith.mulf %465, %475 : vector<8x32xf32>
    %477 = arith.addf %474, %476 : vector<8x32xf32>
    %478 = math.tanh %477 : vector<8x32xf32>
    %cst_102 = arith.constant 1.000000e+00 : f32
    %479 = vector.broadcast %cst_102 : f32 to vector<8x32xf32>
    %480 = arith.subf %479, %473 : vector<8x32xf32>
    %481 = arith.mulf %480, %478 : vector<8x32xf32>
    %482 = arith.mulf %473, %457 : vector<8x32xf32>
    %483 = arith.addf %481, %482 : vector<8x32xf32>
    %484 = vector.extract_strided_slice %455 {offsets = [0, 96], sizes = [8, 96], strides = [1, 1]} : vector<8x192xf32> to vector<8x96xf32>
    %485 = vector.extract_strided_slice %442 {offsets = [0, 32], sizes = [8, 32], strides = [1, 1]} : vector<8x64xf32> to vector<8x32xf32>
    %486 = vector.extract_strided_slice %452 {offsets = [0, 0], sizes = [8, 32], strides = [1, 1]} : vector<8x96xf32> to vector<8x32xf32>
    %487 = vector.extract_strided_slice %484 {offsets = [0, 0], sizes = [8, 32], strides = [1, 1]} : vector<8x96xf32> to vector<8x32xf32>
    %488 = arith.addf %486, %487 : vector<8x32xf32>
    %489 = arith.negf %488 : vector<8x32xf32>
    %490 = math.exp %489 : vector<8x32xf32>
    %cst_103 = arith.constant 1.000000e+00 : f32
    %491 = vector.broadcast %cst_103 : f32 to vector<8x32xf32>
    %492 = arith.addf %491, %490 : vector<8x32xf32>
    %493 = arith.divf %491, %492 : vector<8x32xf32>
    %494 = vector.extract_strided_slice %452 {offsets = [0, 32], sizes = [8, 32], strides = [1, 1]} : vector<8x96xf32> to vector<8x32xf32>
    %495 = vector.extract_strided_slice %484 {offsets = [0, 32], sizes = [8, 32], strides = [1, 1]} : vector<8x96xf32> to vector<8x32xf32>
    %496 = arith.addf %494, %495 : vector<8x32xf32>
    %497 = arith.negf %496 : vector<8x32xf32>
    %498 = math.exp %497 : vector<8x32xf32>
    %cst_104 = arith.constant 1.000000e+00 : f32
    %499 = vector.broadcast %cst_104 : f32 to vector<8x32xf32>
    %500 = arith.addf %499, %498 : vector<8x32xf32>
    %501 = arith.divf %499, %500 : vector<8x32xf32>
    %502 = vector.extract_strided_slice %452 {offsets = [0, 64], sizes = [8, 32], strides = [1, 1]} : vector<8x96xf32> to vector<8x32xf32>
    %503 = vector.extract_strided_slice %484 {offsets = [0, 64], sizes = [8, 32], strides = [1, 1]} : vector<8x96xf32> to vector<8x32xf32>
    %504 = arith.mulf %493, %503 : vector<8x32xf32>
    %505 = arith.addf %502, %504 : vector<8x32xf32>
    %506 = math.tanh %505 : vector<8x32xf32>
    %cst_105 = arith.constant 1.000000e+00 : f32
    %507 = vector.broadcast %cst_105 : f32 to vector<8x32xf32>
    %508 = arith.subf %507, %501 : vector<8x32xf32>
    %509 = arith.mulf %508, %506 : vector<8x32xf32>
    %510 = arith.mulf %501, %485 : vector<8x32xf32>
    %511 = arith.addf %509, %510 : vector<8x32xf32>
    %512 = tpu.concatenate %483, %511 in 1 : vector<8x32xf32>, vector<8x32xf32> -> vector<8x64xf32>
    %513 = arith.addf %443, %512 : vector<8x64xf32>
    %c7_i32_106 = arith.constant 7 : i32
    %c8_i32_107 = arith.constant 8 : i32
    %514 = arith.muli %c7_i32_106, %c8_i32_107 : i32
    %515 = tpu.assume_multiple %514, 8 : i32
    %c7_i32_108 = arith.constant 7 : i32
    %516 = arith.subi %c7_i32_108, %c7_i32_106 : i32
    %c8_i32_109 = arith.constant 8 : i32
    %517 = arith.muli %516, %c8_i32_109 : i32
    %518 = tpu.assume_multiple %517, 8 : i32
    %519 = arith.index_cast %515 : i32 to index
    %c0_110 = arith.constant 0 : index
    %520 = vector.load %arg12[%519, %c0_110] : memref<64x96xf32, #tpu.memory_space<vmem>>, vector<8x96xf32>
    %521 = arith.index_cast %518 : i32 to index
    %c0_111 = arith.constant 0 : index
    %522 = vector.load %arg13[%521, %c0_111] : memref<64x96xf32, #tpu.memory_space<vmem>>, vector<8x96xf32>
    %523 = arith.truncf %512 : vector<8x64xf32> to vector<8x64xbf16>
    %cst_112 = arith.constant dense<0.000000e+00> : vector<8x192xf32>
    %524 = tpu.matmul %523, %19, %cst_112 {dimension_numbers = #tpu.dot_dimension_numbers<[1], [0], [0], [1], [0, 0, 1, 1], [], []>} : vector<8x64xbf16>, vector<64x192xbf16>, vector<8x192xf32> -> vector<8x192xf32>
    %525 = arith.addf %524, %22 : vector<8x192xf32>
    %526 = vector.extract_strided_slice %525 {offsets = [0, 0], sizes = [8, 96], strides = [1, 1]} : vector<8x192xf32> to vector<8x96xf32>
    %527 = vector.extract_strided_slice %512 {offsets = [0, 0], sizes = [8, 32], strides = [1, 1]} : vector<8x64xf32> to vector<8x32xf32>
    %528 = vector.extract_strided_slice %520 {offsets = [0, 0], sizes = [8, 32], strides = [1, 1]} : vector<8x96xf32> to vector<8x32xf32>
    %529 = vector.extract_strided_slice %526 {offsets = [0, 0], sizes = [8, 32], strides = [1, 1]} : vector<8x96xf32> to vector<8x32xf32>
    %530 = arith.addf %528, %529 : vector<8x32xf32>
    %531 = arith.negf %530 : vector<8x32xf32>
    %532 = math.exp %531 : vector<8x32xf32>
    %cst_113 = arith.constant 1.000000e+00 : f32
    %533 = vector.broadcast %cst_113 : f32 to vector<8x32xf32>
    %534 = arith.addf %533, %532 : vector<8x32xf32>
    %535 = arith.divf %533, %534 : vector<8x32xf32>
    %536 = vector.extract_strided_slice %520 {offsets = [0, 32], sizes = [8, 32], strides = [1, 1]} : vector<8x96xf32> to vector<8x32xf32>
    %537 = vector.extract_strided_slice %526 {offsets = [0, 32], sizes = [8, 32], strides = [1, 1]} : vector<8x96xf32> to vector<8x32xf32>
    %538 = arith.addf %536, %537 : vector<8x32xf32>
    %539 = arith.negf %538 : vector<8x32xf32>
    %540 = math.exp %539 : vector<8x32xf32>
    %cst_114 = arith.constant 1.000000e+00 : f32
    %541 = vector.broadcast %cst_114 : f32 to vector<8x32xf32>
    %542 = arith.addf %541, %540 : vector<8x32xf32>
    %543 = arith.divf %541, %542 : vector<8x32xf32>
    %544 = vector.extract_strided_slice %520 {offsets = [0, 64], sizes = [8, 32], strides = [1, 1]} : vector<8x96xf32> to vector<8x32xf32>
    %545 = vector.extract_strided_slice %526 {offsets = [0, 64], sizes = [8, 32], strides = [1, 1]} : vector<8x96xf32> to vector<8x32xf32>
    %546 = arith.mulf %535, %545 : vector<8x32xf32>
    %547 = arith.addf %544, %546 : vector<8x32xf32>
    %548 = math.tanh %547 : vector<8x32xf32>
    %cst_115 = arith.constant 1.000000e+00 : f32
    %549 = vector.broadcast %cst_115 : f32 to vector<8x32xf32>
    %550 = arith.subf %549, %543 : vector<8x32xf32>
    %551 = arith.mulf %550, %548 : vector<8x32xf32>
    %552 = arith.mulf %543, %527 : vector<8x32xf32>
    %553 = arith.addf %551, %552 : vector<8x32xf32>
    %554 = vector.extract_strided_slice %525 {offsets = [0, 96], sizes = [8, 96], strides = [1, 1]} : vector<8x192xf32> to vector<8x96xf32>
    %555 = vector.extract_strided_slice %512 {offsets = [0, 32], sizes = [8, 32], strides = [1, 1]} : vector<8x64xf32> to vector<8x32xf32>
    %556 = vector.extract_strided_slice %522 {offsets = [0, 0], sizes = [8, 32], strides = [1, 1]} : vector<8x96xf32> to vector<8x32xf32>
    %557 = vector.extract_strided_slice %554 {offsets = [0, 0], sizes = [8, 32], strides = [1, 1]} : vector<8x96xf32> to vector<8x32xf32>
    %558 = arith.addf %556, %557 : vector<8x32xf32>
    %559 = arith.negf %558 : vector<8x32xf32>
    %560 = math.exp %559 : vector<8x32xf32>
    %cst_116 = arith.constant 1.000000e+00 : f32
    %561 = vector.broadcast %cst_116 : f32 to vector<8x32xf32>
    %562 = arith.addf %561, %560 : vector<8x32xf32>
    %563 = arith.divf %561, %562 : vector<8x32xf32>
    %564 = vector.extract_strided_slice %522 {offsets = [0, 32], sizes = [8, 32], strides = [1, 1]} : vector<8x96xf32> to vector<8x32xf32>
    %565 = vector.extract_strided_slice %554 {offsets = [0, 32], sizes = [8, 32], strides = [1, 1]} : vector<8x96xf32> to vector<8x32xf32>
    %566 = arith.addf %564, %565 : vector<8x32xf32>
    %567 = arith.negf %566 : vector<8x32xf32>
    %568 = math.exp %567 : vector<8x32xf32>
    %cst_117 = arith.constant 1.000000e+00 : f32
    %569 = vector.broadcast %cst_117 : f32 to vector<8x32xf32>
    %570 = arith.addf %569, %568 : vector<8x32xf32>
    %571 = arith.divf %569, %570 : vector<8x32xf32>
    %572 = vector.extract_strided_slice %522 {offsets = [0, 64], sizes = [8, 32], strides = [1, 1]} : vector<8x96xf32> to vector<8x32xf32>
    %573 = vector.extract_strided_slice %554 {offsets = [0, 64], sizes = [8, 32], strides = [1, 1]} : vector<8x96xf32> to vector<8x32xf32>
    %574 = arith.mulf %563, %573 : vector<8x32xf32>
    %575 = arith.addf %572, %574 : vector<8x32xf32>
    %576 = math.tanh %575 : vector<8x32xf32>
    %cst_118 = arith.constant 1.000000e+00 : f32
    %577 = vector.broadcast %cst_118 : f32 to vector<8x32xf32>
    %578 = arith.subf %577, %571 : vector<8x32xf32>
    %579 = arith.mulf %578, %576 : vector<8x32xf32>
    %580 = arith.mulf %571, %555 : vector<8x32xf32>
    %581 = arith.addf %579, %580 : vector<8x32xf32>
    %582 = tpu.concatenate %553, %581 in 1 : vector<8x32xf32>, vector<8x32xf32> -> vector<8x64xf32>
    %583 = arith.addf %513, %582 : vector<8x64xf32>
    %c8_i32_119 = arith.constant 8 : i32
    %c0_120 = arith.constant 0 : index
    %c0_121 = arith.constant 0 : index
    %584 = vector.load %arg9[%c0_120, %c0_121] : memref<64x10xf32, #tpu.memory_space<vmem>>, vector<64x10xf32>
    %cst_122 = arith.constant dense<0.000000e+00> : vector<8x10xf32>
    %585 = tpu.matmul %583, %584, %cst_122 {dimension_numbers = #tpu.dot_dimension_numbers<[1], [0], [0], [1], [0, 0, 1, 1], [], []>} : vector<8x64xf32>, vector<64x10xf32>, vector<8x10xf32> -> vector<8x10xf32>
    %c0_123 = arith.constant 0 : index
    %c0_124 = arith.constant 0 : index
    %586 = vector.load %arg10[%c0_123, %c0_124] : memref<1x10xf32, #tpu.memory_space<vmem>>, vector<1x10xf32>
    %cst_125 = arith.constant 8.000000e+00 : f32
    %587 = vector.broadcast %cst_125 : f32 to vector<1x10xf32>
    %588 = arith.mulf %586, %587 : vector<1x10xf32>
    %589 = vector.broadcast %588 : vector<1x10xf32> to vector<8x10xf32>
    %590 = arith.addf %585, %589 : vector<8x10xf32>
    %c0_126 = arith.constant 0 : index
    %c0_127 = arith.constant 0 : index
    %591 = vector.load %arg11[%c0_126, %c0_127] : memref<8x10xf32, #tpu.memory_space<vmem>>, vector<8x10xf32>
    tpu.vector_store %arg11[%c0_126, %c0_127], %590 {strides = array<i32>} : memref<8x10xf32, #tpu.memory_space<vmem>>, vector<8x10xf32>,
    return
  }
}

</mosaic_0001>

<llo_original>
// kernel: bigru_forward.1
$region0: #{bigru_forward.1}
  #allocation0 [shape = 'u32[]', space=smem, size = 0x4, offset = 0x4, fixed_abs, tag = 'smem constant byte address 0x4 - core index']
  #allocation1 [shape = 'u32[144,128]{1,0:T(1,128)}', space=vmem, size = 0x12000, scoped, tag = 'internal scratch']
  #allocation2 [shape = 'f32[64,96]{1,0:T(8,128)}', space=vmem, size = 0x8000, scoped, tag = 'scratch operand']
  #allocation3 [shape = 'f32[64,96]{1,0:T(8,128)}', space=vmem, size = 0x8000, scoped, tag = 'scratch operand']
  %s0 = inlined_call_operand.vmem [shape: bf16[64,16], index: 0, kind: input, shape index: {}]
  %s1 = inlined_call_operand.vmem [shape: bf16[16,16], index: 1, kind: input, shape index: {}]
  %s2 = inlined_call_operand.vmem [shape: f32[1,16], index: 2, kind: input, shape index: {}]
  %s3 = inlined_call_operand.vmem [shape: bf16[16,96], index: 3, kind: input, shape index: {}]
  %s4 = inlined_call_operand.vmem [shape: f32[1,96], index: 4, kind: input, shape index: {}]
  %s5 = inlined_call_operand.vmem [shape: bf16[16,96], index: 5, kind: input, shape index: {}]
  %s6 = inlined_call_operand.vmem [shape: f32[1,96], index: 6, kind: input, shape index: {}]
  %s7 = inlined_call_operand.vmem [shape: bf16[64,192], index: 7, kind: input, shape index: {}]
  %s8 = inlined_call_operand.vmem [shape: f32[1,192], index: 8, kind: input, shape index: {}]
  %s9 = inlined_call_operand.vmem [shape: f32[64,10], index: 9, kind: input, shape index: {}]
  %s10 = inlined_call_operand.vmem [shape: f32[1,10], index: 10, kind: input, shape index: {}]
  %s11 = inlined_call_operand.vmem [shape: f32[8,10], index: 11, kind: output, shape index: {}]
  %s12 = sld [smem:[#allocation0]]
  $region54: #{bigru_forward.1} parent=0
    _
  %s14 = ssub.s32 1, %s12
  %s15 = scalar_select 0, %s14, %s12
  // Predicated region
  $region2: #{bigru_forward.1} parent=0 // pred_check
    _
  $region3: #{bigru_forward.1} parent=0 // pred_check_branch
    %17 = sbr.rel (0) target = $region5
  $region4: #{bigru_forward.1} parent=0 // pred_region
    _
  $region5: #{bigru_forward.1} parent=0 // pred_fallthru
    _
  // Predicated region
  $region6: #{bigru_forward.1} parent=0 // pred_check
    _
  $region7: #{bigru_forward.1} parent=0 // pred_check_branch
    %19 = sbr.rel (0) target = $region9
  $region8: #{bigru_forward.1} parent=0 // pred_region
    _
  $region9: #{bigru_forward.1} parent=0 // pred_fallthru
    _
  // Predicated region
  $region10: #{bigru_forward.1} parent=0 // pred_check
    _
  $region11: #{bigru_forward.1} parent=0 // pred_check_branch
    %21 = sbr.rel (0) target = $region13
  $region12: #{bigru_forward.1} parent=0 // pred_region
    _
  $region13: #{bigru_forward.1} parent=0 // pred_fallthru
    _
  // Predicated region
  $region14: #{bigru_forward.1} parent=0 // pred_check
    _
  $region15: #{bigru_forward.1} parent=0 // pred_check_branch
    %23 = sbr.rel (0) target = $region17
  $region16: #{bigru_forward.1} parent=0 // pred_region
    _
  $region17: #{bigru_forward.1} parent=0 // pred_fallthru
    _
  // Predicated region
  $region18: #{bigru_forward.1} parent=0 // pred_check
    _
  $region19: #{bigru_forward.1} parent=0 // pred_check_branch
    %25 = sbr.rel (0) target = $region21
  $region20: #{bigru_forward.1} parent=0 // pred_region
    _
  $region21: #{bigru_forward.1} parent=0 // pred_fallthru
    _
  // Predicated region
  $region22: #{bigru_forward.1} parent=0 // pred_check
    _
  $region23: #{bigru_forward.1} parent=0 // pred_check_branch
    %27 = sbr.rel (0) target = $region25
  $region24: #{bigru_forward.1} parent=0 // pred_region
    _
  $region25: #{bigru_forward.1} parent=0 // pred_fallthru
    _
  // Predicated region
  $region26: #{bigru_forward.1} parent=0 // pred_check
    _
  $region27: #{bigru_forward.1} parent=0 // pred_check_branch
    %29 = sbr.rel (0) target = $region29
  $region28: #{bigru_forward.1} parent=0 // pred_region
    _
  $region29: #{bigru_forward.1} parent=0 // pred_fallthru
    _
  // Predicated region
  $region30: #{bigru_forward.1} parent=0 // pred_check
    _
  $region31: #{bigru_forward.1} parent=0 // pred_check_branch
    %31 = sbr.rel (0) target = $region33
  $region32: #{bigru_forward.1} parent=0 // pred_region
    _
  $region33: #{bigru_forward.1} parent=0 // pred_fallthru
    _
  // Predicated region
  $region34: #{bigru_forward.1} parent=0 // pred_check
    _
  $region35: #{bigru_forward.1} parent=0 // pred_check_branch
    %33 = sbr.rel (0) target = $region37
  $region36: #{bigru_forward.1} parent=0 // pred_region
    _
  $region37: #{bigru_forward.1} parent=0 // pred_fallthru
    _
  // Predicated region
  $region38: #{bigru_forward.1} parent=0 // pred_check
    _
  $region39: #{bigru_forward.1} parent=0 // pred_check_branch
    %35 = sbr.rel (0) target = $region41
  $region40: #{bigru_forward.1} parent=0 // pred_region
    _
  $region41: #{bigru_forward.1} parent=0 // pred_fallthru
    _
  // Predicated region
  $region42: #{bigru_forward.1} parent=0 // pred_check
    _
  $region43: #{bigru_forward.1} parent=0 // pred_check_branch
    %37 = sbr.rel (0) target = $region45
  $region44: #{bigru_forward.1} parent=0 // pred_region
    _
  $region45: #{bigru_forward.1} parent=0 // pred_fallthru
    _
  %v39 = vld [vmem:[%s0] sm:$0xf]
  %v40 = vld [vmem:[%s0 + $0x4] sm:$0xf]
  %v41 = vld [vmem:[%s0 + $0x8] sm:$0xf]
  %v42 = vld [vmem:[%s0 + $0xc] sm:$0xf]
  %v43 = vld [vmem:[%s0 + $0x10] sm:$0xf]
  %v44 = vld [vmem:[%s0 + $0x14] sm:$0xf]
  %v45 = vld [vmem:[%s0 + $0x18] sm:$0xf]
  %v46 = vld [vmem:[%s0 + $0x1c] sm:$0xf]
  %v47 = vld [vmem:[%s1] sm:$0xf]
  %v48 = vld [vmem:[%s1 + $0x4] sm:$0xf]
  %v49 = vld [vmem:[%s2] sm:$0x1]
  %v51 = vlaneseq
  %v52 = vshrl.u32 %v51, 7
  %v53 = vsub.s32 0, %v52
  %v54 = vrot.slane %v49, %v53
  %v64 = vunpack.c.l.b16 %v39
  %v65 = vunpack.c.l.b16 %v40
  %v66 = vunpack.c.l.b16 %v41
  %v67 = vunpack.c.l.b16 %v42
  %v68 = vunpack.c.l.b16 %v43
  %v69 = vunpack.c.l.b16 %v44
  %v70 = vunpack.c.l.b16 %v45
  %v71 = vunpack.c.l.b16 %v46
  %v72 = vpack.c.b16 %v65, %v64
  %v73 = vpack.c.b16 %v67, %v66
  %v74 = vpack.c.b16 %v69, %v68
  %v75 = vpack.c.b16 %v71, %v70
  %v78 = vunpack.c.l.b16 %v47
  %v79 = vunpack.c.l.b16 %v48
  %v80 = vpack.c.b16 %v79, %v78
  %vm82 = vcmask 130048
  %v84 = vsel %vm82, %v72, 0
  %v87 = vsel %vm82, %v73, 0
  %v90 = vsel %vm82, %v74, 0
  %v93 = vsel %vm82, %v75, 0
  %95 = vmatprep.subr.bf16.mxu0 0
  %96 = vmatpush1.bf16.msra.mxu0 0
  %97 = vmatprep.subr.bf16.mxu0 0
  %98 = vmatpush1.bf16.msra.mxu0 0
  %99 = vmatprep.subr.bf16.mxu0 0
  %100 = vmatpush1.bf16.msra.mxu0 0
  %101 = vmatprep.subr.bf16.mxu0 0
  %102 = vmatpush1.bf16.msra.mxu0 0
  %103 = vmatprep.subr.bf16.mxu0 0
  %104 = vmatpush1.bf16.msra.mxu0 0
  %105 = vmatprep.subr.bf16.mxu0 0
  %106 = vmatpush1.bf16.msra.mxu0 0
  %107 = vmatprep.subr.bf16.mxu0 0
  %108 = vmatpush1.bf16.msra.mxu0 0
  %109 = vmatprep.subr.bf16.mxu0 0
  %110 = vmatpush1.bf16.msra.mxu0 %v80
  %111 = vmatprep.subr.bf16.mxu0 0
  %112 = vmatpush2.bf16.msra.mxu0 0
  %113 = vmatprep.subr.bf16.mxu0 0
  %114 = vmatpush2.bf16.msra.mxu0 0
  %115 = vmatprep.subr.bf16.mxu0 0
  %116 = vmatpush2.bf16.msra.mxu0 0
  %117 = vmatprep.subr.bf16.mxu0 0
  %118 = vmatpush2.bf16.msra.mxu0 0
  %119 = vmatprep.subr.bf16.mxu0 0
  %120 = vmatpush2.bf16.msra.mxu0 0
  %121 = vmatprep.subr.bf16.mxu0 0
  %122 = vmatpush2.bf16.msra.mxu0 0
  %123 = vmatprep.subr.bf16.mxu0 0
  %124 = vmatpush2.bf16.msra.mxu0 0
  %125 = vmatprep.subr.bf16.mxu0 0
  %126 = vmatpush2.bf16.msra.mxu0 0
  %127 = vmatprep.mubr.bf16.mxu0 0
  %128 = vmatmul.mubr.bf16.gmra.mxu0 %v84
  %v129 = vpop.f32.mrf.mxu0
  %v130 = vadd.f32 %v54, %v129
  %v131 = vpop.f32.mrf.mxu0
  %v132 = vpop.f32.mrf.mxu0
  %v133 = vadd.f32 %v54, %v132
  %v134 = vpop.f32.mrf.mxu0
  %135 = vmatprep.mubr.bf16.mxu0 0
  %136 = vmatmul.mubr.bf16.gmra.mxu0 %v87
  %v137 = vpop.f32.mrf.mxu0
  %v138 = vadd.f32 %v54, %v137
  %v139 = vpop.f32.mrf.mxu0
  %v140 = vpop.f32.mrf.mxu0
  %v141 = vadd.f32 %v54, %v140
  %v142 = vpop.f32.mrf.mxu0
  %143 = vmatprep.mubr.bf16.mxu0 0
  %144 = vmatmul.mubr.bf16.gmra.mxu0 %v90
  %v145 = vpop.f32.mrf.mxu0
  %v146 = vadd.f32 %v54, %v145
  %v147 = vpop.f32.mrf.mxu0
  %v148 = vpop.f32.mrf.mxu0
  %v149 = vadd.f32 %v54, %v148
  %v150 = vpop.f32.mrf.mxu0
  %151 = vmatprep.mubr.bf16.mxu0 0
  %152 = vmatmul.mubr.bf16.gmra.mxu0 %v93
  %v153 = vpop.f32.mrf.mxu0
  %v154 = vadd.f32 %v54, %v153
  %v155 = vpop.f32.mrf.mxu0
  %v156 = vpop.f32.mrf.mxu0
  %v157 = vadd.f32 %v54, %v156
  %v158 = vpop.f32.mrf.mxu0
  %159 = vdwg.mxu0
  %v160 = vpack.c.bf16 %v133, %v130
  %v161 = vpack.c.bf16 %v141, %v138
  %v162 = vpack.c.bf16 %v149, %v146
  %v163 = vpack.c.bf16 %v157, %v154
  %v164 = vld [vmem:[%s3] sm:$0xf]
  %v165 = vld [vmem:[%s3 + $0x4] sm:$0xf]
  %v166 = vld [vmem:[%s4] sm:$0x1]
  %v168 = vlaneseq
  %v169 = vshrl.u32 %v168, 7
  %v170 = vsub.s32 0, %v169
  %v171 = vrot.slane %v166, %v170
  %v175 = vunpack.c.l.b16 %v164
  %v176 = vunpack.c.l.b16 %v165
  %v177 = vpack.c.b16 %v176, %v175
  %v180 = vsel %vm82, %v160, 0
  %v183 = vsel %vm82, %v161, 0
  %v186 = vsel %vm82, %v162, 0
  %v189 = vsel %vm82, %v163, 0
  %191 = vmatprep.subr.bf16.mxu0 0
  %192 = vmatpush1.bf16.msra.mxu0 0
  %193 = vmatprep.subr.bf16.mxu0 0
  %194 = vmatpush1.bf16.msra.mxu0 0
  %195 = vmatprep.subr.bf16.mxu0 0
  %196 = vmatpush1.bf16.msra.mxu0 0
  %197 = vmatprep.subr.bf16.mxu0 0
  %198 = vmatpush1.bf16.msra.mxu0 0
  %199 = vmatprep.subr.bf16.mxu0 0
  %200 = vmatpush1.bf16.msra.mxu0 0
  %201 = vmatprep.subr.bf16.mxu0 0
  %202 = vmatpush1.bf16.msra.mxu0 0
  %203 = vmatprep.subr.bf16.mxu0 0
  %204 = vmatpush1.bf16.msra.mxu0 0
  %205 = vmatprep.subr.bf16.mxu0 0
  %206 = vmatpush1.bf16.msra.mxu0 %v177
  %207 = vmatprep.subr.bf16.mxu0 0
  %208 = vmatpush2.bf16.msra.mxu0 0
  %209 = vmatprep.subr.bf16.mxu0 0
  %210 = vmatpush2.bf16.msra.mxu0 0
  %211 = vmatprep.subr.bf16.mxu0 0
  %212 = vmatpush2.bf16.msra.mxu0 0
  %213 = vmatprep.subr.bf16.mxu0 0
  %214 = vmatpush2.bf16.msra.mxu0 0
  %215 = vmatprep.subr.bf16.mxu0 0
  %216 = vmatpush2.bf16.msra.mxu0 0
  %217 = vmatprep.subr.bf16.mxu0 0
  %218 = vmatpush2.bf16.msra.mxu0 0
  %219 = vmatprep.subr.bf16.mxu0 0
  %220 = vmatpush2.bf16.msra.mxu0 0
  %221 = vmatprep.subr.bf16.mxu0 0
  %222 = vmatpush2.bf16.msra.mxu0 0
  %223 = vmatprep.mubr.bf16.mxu0 0
  %224 = vmatmul.mubr.bf16.gmra.mxu0 %v180
  %v225 = vpop.f32.mrf.mxu0
  %v226 = vadd.f32 %v171, %v225
  %v227 = vpop.f32.mrf.mxu0
  %v228 = vpop.f32.mrf.mxu0
  %v229 = vadd.f32 %v171, %v228
  %v230 = vpop.f32.mrf.mxu0
  %231 = vmatprep.mubr.bf16.mxu0 0
  %232 = vmatmul.mubr.bf16.gmra.mxu0 %v183
  %v233 = vpop.f32.mrf.mxu0
  %v234 = vadd.f32 %v171, %v233
  %v235 = vpop.f32.mrf.mxu0
  %v236 = vpop.f32.mrf.mxu0
  %v237 = vadd.f32 %v171, %v236
  %v238 = vpop.f32.mrf.mxu0
  %239 = vmatprep.mubr.bf16.mxu0 0
  %240 = vmatmul.mubr.bf16.gmra.mxu0 %v186
  %v241 = vpop.f32.mrf.mxu0
  %v242 = vadd.f32 %v171, %v241
  %v243 = vpop.f32.mrf.mxu0
  %v244 = vpop.f32.mrf.mxu0
  %v245 = vadd.f32 %v171, %v244
  %v246 = vpop.f32.mrf.mxu0
  %247 = vmatprep.mubr.bf16.mxu0 0
  %248 = vmatmul.mubr.bf16.gmra.mxu0 %v189
  %v249 = vpop.f32.mrf.mxu0
  %v250 = vadd.f32 %v171, %v249
  %v251 = vpop.f32.mrf.mxu0
  %v252 = vpop.f32.mrf.mxu0
  %v253 = vadd.f32 %v171, %v252
  %v254 = vpop.f32.mrf.mxu0
  %255 = vdwg.mxu0
  %vm256 = vcmask 785408
  %257 = vst.msk [vmem:[#allocation2] sm:$0xff] %vm256, %v226
  %258 = vst.msk [vmem:[#allocation2 + $0x8] sm:$0xff] %vm256, %v229
  %259 = vst.msk [vmem:[#allocation2 + $0x10] sm:$0xff] %vm256, %v234
  %260 = vst.msk [vmem:[#allocation2 + $0x18] sm:$0xff] %vm256, %v237
  %261 = vst.msk [vmem:[#allocation2 + $0x20] sm:$0xff] %vm256, %v242
  %262 = vst.msk [vmem:[#allocation2 + $0x28] sm:$0xff] %vm256, %v245
  %263 = vst.msk [vmem:[#allocation2 + $0x30] sm:$0xff] %vm256, %v250
  %264 = vst.msk [vmem:[#allocation2 + $0x38] sm:$0xff] %vm256, %v253
  %v265 = vld [vmem:[%s5] sm:$0xf]
  %v266 = vld [vmem:[%s5 + $0x4] sm:$0xf]
  %v267 = vld [vmem:[%s6] sm:$0x1]
  %v269 = vlaneseq
  %v270 = vshrl.u32 %v269, 7
  %v271 = vsub.s32 0, %v270
  %v272 = vrot.slane %v267, %v271
  %v276 = vunpack.c.l.b16 %v265
  %v277 = vunpack.c.l.b16 %v266
  %v278 = vpack.c.b16 %v277, %v276
  %280 = vmatprep.subr.bf16.mxu0 0
  %281 = vmatpush1.bf16.msra.mxu0 0
  %282 = vmatprep.subr.bf16.mxu0 0
  %283 = vmatpush1.bf16.msra.mxu0 0
  %284 = vmatprep.subr.bf16.mxu0 0
  %285 = vmatpush1.bf16.msra.mxu0 0
  %286 = vmatprep.subr.bf16.mxu0 0
  %287 = vmatpush1.bf16.msra.mxu0 0
  %288 = vmatprep.subr.bf16.mxu0 0
  %289 = vmatpush1.bf16.msra.mxu0 0
  %290 = vmatprep.subr.bf16.mxu0 0
  %291 = vmatpush1.bf16.msra.mxu0 0
  %292 = vmatprep.subr.bf16.mxu0 0
  %293 = vmatpush1.bf16.msra.mxu0 0
  %294 = vmatprep.subr.bf16.mxu0 0
  %295 = vmatpush1.bf16.msra.mxu0 %v278
  %296 = vmatprep.subr.bf16.mxu0 0
  %297 = vmatpush2.bf16.msra.mxu0 0
  %298 = vmatprep.subr.bf16.mxu0 0
  %299 = vmatpush2.bf16.msra.mxu0 0
  %300 = vmatprep.subr.bf16.mxu0 0
  %301 = vmatpush2.bf16.msra.mxu0 0
  %302 = vmatprep.subr.bf16.mxu0 0
  %303 = vmatpush2.bf16.msra.mxu0 0
  %304 = vmatprep.subr.bf16.mxu0 0
  %305 = vmatpush2.bf16.msra.mxu0 0
  %306 = vmatprep.subr.bf16.mxu0 0
  %307 = vmatpush2.bf16.msra.mxu0 0
  %308 = vmatprep.subr.bf16.mxu0 0
  %309 = vmatpush2.bf16.msra.mxu0 0
  %310 = vmatprep.subr.bf16.mxu0 0
  %311 = vmatpush2.bf16.msra.mxu0 0
  %312 = vmatprep.mubr.bf16.mxu0 0
  %313 = vmatmul.mubr.bf16.gmra.mxu0 %v180
  %v314 = vpop.f32.mrf.mxu0
  %v315 = vadd.f32 %v272, %v314
  %v316 = vpop.f32.mrf.mxu0
  %v317 = vpop.f32.mrf.mxu0
  %v318 = vadd.f32 %v272, %v317
  %v319 = vpop.f32.mrf.mxu0
  %320 = vmatprep.mubr.bf16.mxu0 0
  %321 = vmatmul.mubr.bf16.gmra.mxu0 %v183
  %v322 = vpop.f32.mrf.mxu0
  %v323 = vadd.f32 %v272, %v322
  %v324 = vpop.f32.mrf.mxu0
  %v325 = vpop.f32.mrf.mxu0
  %v326 = vadd.f32 %v272, %v325
  %v327 = vpop.f32.mrf.mxu0
  %328 = vmatprep.mubr.bf16.mxu0 0
  %329 = vmatmul.mubr.bf16.gmra.mxu0 %v186
  %v330 = vpop.f32.mrf.mxu0
  %v331 = vadd.f32 %v272, %v330
  %v332 = vpop.f32.mrf.mxu0
  %v333 = vpop.f32.mrf.mxu0
  %v334 = vadd.f32 %v272, %v333
  %v335 = vpop.f32.mrf.mxu0
  %336 = vmatprep.mubr.bf16.mxu0 0
  %337 = vmatmul.mubr.bf16.gmra.mxu0 %v189
  %v338 = vpop.f32.mrf.mxu0
  %v339 = vadd.f32 %v272, %v338
  %v340 = vpop.f32.mrf.mxu0
  %v341 = vpop.f32.mrf.mxu0
  %v342 = vadd.f32 %v272, %v341
  %v343 = vpop.f32.mrf.mxu0
  %344 = vdwg.mxu0
  %345 = vst.msk [vmem:[#allocation3] sm:$0xff] %vm256, %v315
  %346 = vst.msk [vmem:[#allocation3 + $0x8] sm:$0xff] %vm256, %v318
  %347 = vst.msk [vmem:[#allocation3 + $0x10] sm:$0xff] %vm256, %v323
  %348 = vst.msk [vmem:[#allocation3 + $0x18] sm:$0xff] %vm256, %v326
  %349 = vst.msk [vmem:[#allocation3 + $0x20] sm:$0xff] %vm256, %v331
  %350 = vst.msk [vmem:[#allocation3 + $0x28] sm:$0xff] %vm256, %v334
  %351 = vst.msk [vmem:[#allocation3 + $0x30] sm:$0xff] %vm256, %v339
  %352 = vst.msk [vmem:[#allocation3 + $0x38] sm:$0xff] %vm256, %v342
  %v353 = vld [vmem:[%s7] sm:$0xff]
  %v354 = vld [vmem:[%s7 + $0x8] sm:$0xff]
  %v355 = vld [vmem:[%s7 + $0x10] sm:$0xff]
  %v356 = vld [vmem:[%s7 + $0x18] sm:$0xff]
  %v357 = vld [vmem:[%s7 + $0x20] sm:$0xff]
  %v358 = vld [vmem:[%s7 + $0x28] sm:$0xff]
  %v359 = vld [vmem:[%s7 + $0x30] sm:$0xff]
  %v360 = vld [vmem:[%s7 + $0x38] sm:$0xff]
  %v361 = vld [vmem:[%s8] sm:$0x3]
  %v363 = vlaneseq
  %v364 = vshrl.u32 %v363, 7
  %v365 = vsub.s32 0, %v364
  %v366 = vrot.slane %v361, %v365
  %v367 = vlaneseq
  %v368 = vshrl.u32 %v367, 7
  %v369 = vsub.s32 1, %v368
  %v370 = vrot.slane %v361, %v369
  %v373 = vld [vmem:[#allocation2] sm:$0xff]
  %s374 = scalar_lea.vmem [#allocation3], 56
  %v375 = vld [vmem:[%s374] sm:$0xff]
  %v384 = vunpack.c.l.b16 %v353
  %v385 = vunpack.c.h.b16 %v353
  %v386 = vunpack.c.l.b16 %v354
  %v387 = vunpack.c.h.b16 %v354
  %v388 = vunpack.c.l.b16 %v355
  %v389 = vunpack.c.h.b16 %v355
  %v390 = vunpack.c.l.b16 %v356
  %v391 = vunpack.c.h.b16 %v356
  %v392 = vunpack.c.l.b16 %v357
  %v393 = vunpack.c.h.b16 %v357
  %v394 = vunpack.c.l.b16 %v358
  %v395 = vunpack.c.h.b16 %v358
  %v396 = vunpack.c.l.b16 %v359
  %v397 = vunpack.c.h.b16 %v359
  %v398 = vunpack.c.l.b16 %v360
  %v399 = vunpack.c.h.b16 %v360
  %v400 = vpack.c.b16 %v386, %v384
  %v401 = vpack.c.b16 %v387, %v385
  %v402 = vpack.c.b16 %v390, %v388
  %v403 = vpack.c.b16 %v391, %v389
  %v404 = vpack.c.b16 %v394, %v392
  %v405 = vpack.c.b16 %v395, %v393
  %v406 = vpack.c.b16 %v398, %v396
  %v407 = vpack.c.b16 %v399, %v397
  %vm416 = vcmask 523264
  %v418 = vsel %vm416, 0, 0
  %420 = vmatprep.subr.bf16.mxu0 0
  %421 = vmatpush1.bf16.msra.mxu0 0
  %422 = vmatprep.subr.bf16.mxu0 0
  %423 = vmatpush1.bf16.msra.mxu0 0
  %424 = vmatprep.subr.bf16.mxu0 0
  %425 = vmatpush1.bf16.msra.mxu0 0
  %426 = vmatprep.subr.bf16.mxu0 0
  %427 = vmatpush1.bf16.msra.mxu0 0
  %428 = vmatprep.subr.bf16.mxu0 %v407
  %429 = vmatpush1.bf16.msra.mxu0 %v406
  %430 = vmatprep.subr.bf16.mxu0 %v405
  %431 = vmatpush1.bf16.msra.mxu0 %v404
  %432 = vmatprep.subr.bf16.mxu0 %v403
  %433 = vmatpush1.bf16.msra.mxu0 %v402
  %434 = vmatprep.subr.bf16.mxu0 %v401
  %435 = vmatpush1.bf16.msra.mxu0 %v400
  %436 = vmatprep.subr.bf16.mxu0 0
  %437 = vmatpush2.bf16.msra.mxu0 0
  %438 = vmatprep.subr.bf16.mxu0 0
  %439 = vmatpush2.bf16.msra.mxu0 0
  %440 = vmatprep.subr.bf16.mxu0 0
  %441 = vmatpush2.bf16.msra.mxu0 0
  %442 = vmatprep.subr.bf16.mxu0 0
  %443 = vmatpush2.bf16.msra.mxu0 0
  %444 = vmatprep.subr.bf16.mxu0 0
  %445 = vmatpush2.bf16.msra.mxu0 0
  %446 = vmatprep.subr.bf16.mxu0 0
  %447 = vmatpush2.bf16.msra.mxu0 0
  %448 = vmatprep.subr.bf16.mxu0 0
  %449 = vmatpush2.bf16.msra.mxu0 0
  %450 = vmatprep.subr.bf16.mxu0 0
  %451 = vmatpush2.bf16.msra.mxu0 0
  %452 = vmatprep.mubr.bf16.mxu0 0
  %453 = vmatmul.mubr.bf16.gmra.mxu0 %v418
  %v454 = vpop.f32.mrf.mxu0
  %v455 = vadd.f32 %v366, %v454
  %v456 = vpop.f32.mrf.mxu0
  %v457 = vadd.f32 %v370, %v456
  %v458 = vpop.f32.mrf.mxu0
  %v459 = vpop.f32.mrf.mxu0
  %460 = vdwg.mxu0
  %v461 = vadd.f32 %v373, %v455
  %v462 = vxor.u32 %v461, 2147483648
  %v463 = vmul.f32 %v462, 1.442695
  %v464 = vpow.pop %v463
  %v465 = vadd.f32 %v464, 1.0
  %v466 = vrcp.pop %v465
  %v467 = vmul.f32 1.0, %v466
  %469 = vrot.lane.b32.xlu0 %v455, 64
  %v470 = vpop.permute.xlu0 %469
  %v472 = vmul.f32 %v467, %v470
  %474 = vrot.lane.b32.xlu0 %v472, 64
  %v475 = vpop.permute.xlu0 %474
  %v477 = vadd.f32 %v373, %v475
  %v478 = vtanh.pop %v477
  %v479 = vsub.f32 1.0, %v467
  %481 = vrot.lane.b32.xlu0 %v478, 96
  %v482 = vpop.permute.xlu0 %481
  %v484 = vmul.f32 %v479, %v482
  %v485 = vmul.f32 %v467, 0.0
  %v486 = vadd.f32 %v484, %v485
  %487 = vrot.lane.b32.xlu0 %v455, 32
  %v488 = vpop.permute.xlu0 %487
  %v490 = vadd.f32 %v375, %v488
  %v491 = vxor.u32 %v490, 2147483648
  %v492 = vmul.f32 %v491, 1.442695
  %v493 = vpow.pop %v492
  %v494 = vadd.f32 %v493, 1.0
  %v495 = vrcp.pop %v494
  %v496 = vmul.f32 1.0, %v495
  %498 = vrot.lane.b32.xlu0 %v457, 32
  %v499 = vpop.permute.xlu0 %498
  %v501 = vadd.f32 %v375, %v499
  %v502 = vxor.u32 %v501, 2147483648
  %v503 = vmul.f32 %v502, 1.442695
  %v504 = vpow.pop %v503
  %v505 = vadd.f32 %v504, 1.0
  %v506 = vrcp.pop %v505
  %v507 = vmul.f32 1.0, %v506
  %508 = vrot.lane.b32.xlu0 %v457, 96
  %v509 = vpop.permute.xlu0 %508
  %v511 = vmul.f32 %v496, %v509
  %513 = vrot.lane.b32.xlu0 %v511, 64
  %v514 = vpop.permute.xlu0 %513
  %v516 = vadd.f32 %v375, %v514
  %v517 = vtanh.pop %v516
  %v518 = vsub.f32 1.0, %v507
  %520 = vrot.lane.b32.xlu0 %v517, 96
  %v521 = vpop.permute.xlu0 %520
  %v523 = vmul.f32 %v518, %v521
  %v524 = vmul.f32 %v507, 0.0
  %v525 = vadd.f32 %v523, %v524
  %527 = vrot.lane.b32.xlu0 %v486, 96
  %v528 = vpop.permute.xlu0 %527
  %vm530 = vcmask 261120
  %v531 = vsel %vm530, %v528, %v525
  %v532 = vadd.f32 %v531, 0.0
  %s533 = scalar_lea.vmem [#allocation2], 8
  %v534 = vld [vmem:[%s533] sm:$0xff]
  %s535 = scalar_lea.vmem [#allocation3], 48
  %v536 = vld [vmem:[%s535] sm:$0xff]
  %v537 = vpack.c.bf16 %v531, %v531
  %v539 = vsel %vm416, %v537, 0
  %541 = vmatprep.subr.bf16.mxu0 0
  %542 = vmatpush1.bf16.msra.mxu0 0
  %543 = vmatprep.subr.bf16.mxu0 0
  %544 = vmatpush1.bf16.msra.mxu0 0
  %545 = vmatprep.subr.bf16.mxu0 0
  %546 = vmatpush1.bf16.msra.mxu0 0
  %547 = vmatprep.subr.bf16.mxu0 0
  %548 = vmatpush1.bf16.msra.mxu0 0
  %549 = vmatprep.subr.bf16.mxu0 %v407
  %550 = vmatpush1.bf16.msra.mxu0 %v406
  %551 = vmatprep.subr.bf16.mxu0 %v405
  %552 = vmatpush1.bf16.msra.mxu0 %v404
  %553 = vmatprep.subr.bf16.mxu0 %v403
  %554 = vmatpush1.bf16.msra.mxu0 %v402
  %555 = vmatprep.subr.bf16.mxu0 %v401
  %556 = vmatpush1.bf16.msra.mxu0 %v400
  %557 = vmatprep.subr.bf16.mxu0 0
  %558 = vmatpush2.bf16.msra.mxu0 0
  %559 = vmatprep.subr.bf16.mxu0 0
  %560 = vmatpush2.bf16.msra.mxu0 0
  %561 = vmatprep.subr.bf16.mxu0 0
  %562 = vmatpush2.bf16.msra.mxu0 0
  %563 = vmatprep.subr.bf16.mxu0 0
  %564 = vmatpush2.bf16.msra.mxu0 0
  %565 = vmatprep.subr.bf16.mxu0 0
  %566 = vmatpush2.bf16.msra.mxu0 0
  %567 = vmatprep.subr.bf16.mxu0 0
  %568 = vmatpush2.bf16.msra.mxu0 0
  %569 = vmatprep.subr.bf16.mxu0 0
  %570 = vmatpush2.bf16.msra.mxu0 0
  %571 = vmatprep.subr.bf16.mxu0 0
  %572 = vmatpush2.bf16.msra.mxu0 0
  %573 = vmatprep.mubr.bf16.mxu0 0
  %574 = vmatmul.mubr.bf16.gmra.mxu0 %v539
  %v575 = vpop.f32.mrf.mxu0
  %v576 = vadd.f32 %v366, %v575
  %v577 = vpop.f32.mrf.mxu0
  %v578 = vadd.f32 %v370, %v577
  %v579 = vpop.f32.mrf.mxu0
  %v580 = vpop.f32.mrf.mxu0
  %581 = vdwg.mxu0
  %v582 = vadd.f32 %v534, %v576
  %v583 = vxor.u32 %v582, 2147483648
  %v584 = vmul.f32 %v583, 1.442695
  %v585 = vpow.pop %v584
  %v586 = vadd.f32 %v585, 1.0
  %v587 = vrcp.pop %v586
  %v588 = vmul.f32 1.0, %v587
  %590 = vrot.lane.b32.xlu0 %v576, 64
  %v591 = vpop.permute.xlu0 %590
  %v593 = vmul.f32 %v588, %v591
  %595 = vrot.lane.b32.xlu0 %v593, 64
  %v596 = vpop.permute.xlu0 %595
  %v598 = vadd.f32 %v534, %v596
  %v599 = vtanh.pop %v598
  %v600 = vsub.f32 1.0, %v588
  %602 = vrot.lane.b32.xlu0 %v599, 96
  %v603 = vpop.permute.xlu0 %602
  %v605 = vmul.f32 %v600, %v603
  %607 = vrot.lane.b32.xlu0 %v531, 32
  %v608 = vpop.permute.xlu0 %607
  %v610 = vmul.f32 %v588, %v608
  %v611 = vadd.f32 %v605, %v610
  %612 = vrot.lane.b32.xlu0 %v576, 32
  %v613 = vpop.permute.xlu0 %612
  %v615 = vadd.f32 %v536, %v613
  %v616 = vxor.u32 %v615, 2147483648
  %v617 = vmul.f32 %v616, 1.442695
  %v618 = vpow.pop %v617
  %v619 = vadd.f32 %v618, 1.0
  %v620 = vrcp.pop %v619
  %v621 = vmul.f32 1.0, %v620
  %623 = vrot.lane.b32.xlu0 %v578, 32
  %v624 = vpop.permute.xlu0 %623
  %v626 = vadd.f32 %v536, %v624
  %v627 = vxor.u32 %v626, 2147483648
  %v628 = vmul.f32 %v627, 1.442695
  %v629 = vpow.pop %v628
  %v630 = vadd.f32 %v629, 1.0
  %v631 = vrcp.pop %v630
  %v632 = vmul.f32 1.0, %v631
  %633 = vrot.lane.b32.xlu0 %v578, 96
  %v634 = vpop.permute.xlu0 %633
  %v636 = vmul.f32 %v621, %v634
  %638 = vrot.lane.b32.xlu0 %v636, 64
  %v639 = vpop.permute.xlu0 %638
  %v641 = vadd.f32 %v536, %v639
  %v642 = vtanh.pop %v641
  %v643 = vsub.f32 1.0, %v632
  %645 = vrot.lane.b32.xlu0 %v642, 96
  %v646 = vpop.permute.xlu0 %645
  %v648 = vmul.f32 %v643, %v646
  %v649 = vmul.f32 %v632, %v531
  %v650 = vadd.f32 %v648, %v649
  %652 = vrot.lane.b32.xlu0 %v611, 96
  %v653 = vpop.permute.xlu0 %652
  %v655 = vsel %vm530, %v653, %v650
  %v656 = vadd.f32 %v532, %v655
  %s657 = scalar_lea.vmem [#allocation2], 16
  %v658 = vld [vmem:[%s657] sm:$0xff]
  %s659 = scalar_lea.vmem [#allocation3], 40
  %v660 = vld [vmem:[%s659] sm:$0xff]
  %v661 = vpack.c.bf16 %v655, %v655
  %v663 = vsel %vm416, %v661, 0
  %665 = vmatprep.subr.bf16.mxu0 0
  %666 = vmatpush1.bf16.msra.mxu0 0
  %667 = vmatprep.subr.bf16.mxu0 0
  %668 = vmatpush1.bf16.msra.mxu0 0
  %669 = vmatprep.subr.bf16.mxu0 0
  %670 = vmatpush1.bf16.msra.mxu0 0
  %671 = vmatprep.subr.bf16.mxu0 0
  %672 = vmatpush1.bf16.msra.mxu0 0
  %673 = vmatprep.subr.bf16.mxu0 %v407
  %674 = vmatpush1.bf16.msra.mxu0 %v406
  %675 = vmatprep.subr.bf16.mxu0 %v405
  %676 = vmatpush1.bf16.msra.mxu0 %v404
  %677 = vmatprep.subr.bf16.mxu0 %v403
  %678 = vmatpush1.bf16.msra.mxu0 %v402
  %679 = vmatprep.subr.bf16.mxu0 %v401
  %680 = vmatpush1.bf16.msra.mxu0 %v400
  %681 = vmatprep.subr.bf16.mxu0 0
  %682 = vmatpush2.bf16.msra.mxu0 0
  %683 = vmatprep.subr.bf16.mxu0 0
  %684 = vmatpush2.bf16.msra.mxu0 0
  %685 = vmatprep.subr.bf16.mxu0 0
  %686 = vmatpush2.bf16.msra.mxu0 0
  %687 = vmatprep.subr.bf16.mxu0 0
  %688 = vmatpush2.bf16.msra.mxu0 0
  %689 = vmatprep.subr.bf16.mxu0 0
  %690 = vmatpush2.bf16.msra.mxu0 0
  %691 = vmatprep.subr.bf16.mxu0 0
  %692 = vmatpush2.bf16.msra.mxu0 0
  %693 = vmatprep.subr.bf16.mxu0 0
  %694 = vmatpush2.bf16.msra.mxu0 0
  %695 = vmatprep.subr.bf16.mxu0 0
  %696 = vmatpush2.bf16.msra.mxu0 0
  %697 = vmatprep.mubr.bf16.mxu0 0
  %698 = vmatmul.mubr.bf16.gmra.mxu0 %v663
  %v699 = vpop.f32.mrf.mxu0
  %v700 = vadd.f32 %v366, %v699
  %v701 = vpop.f32.mrf.mxu0
  %v702 = vadd.f32 %v370, %v701
  %v703 = vpop.f32.mrf.mxu0
  %v704 = vpop.f32.mrf.mxu0
  %705 = vdwg.mxu0
  %v706 = vadd.f32 %v658, %v700
  %v707 = vxor.u32 %v706, 2147483648
  %v708 = vmul.f32 %v707, 1.442695
  %v709 = vpow.pop %v708
  %v710 = vadd.f32 %v709, 1.0
  %v711 = vrcp.pop %v710
  %v712 = vmul.f32 1.0, %v711
  %714 = vrot.lane.b32.xlu0 %v700, 64
  %v715 = vpop.permute.xlu0 %714
  %v717 = vmul.f32 %v712, %v715
  %719 = vrot.lane.b32.xlu0 %v717, 64
  %v720 = vpop.permute.xlu0 %719
  %v722 = vadd.f32 %v658, %v720
  %v723 = vtanh.pop %v722
  %v724 = vsub.f32 1.0, %v712
  %726 = vrot.lane.b32.xlu0 %v723, 96
  %v727 = vpop.permute.xlu0 %726
  %v729 = vmul.f32 %v724, %v727
  %731 = vrot.lane.b32.xlu0 %v655, 32
  %v732 = vpop.permute.xlu0 %731
  %v734 = vmul.f32 %v712, %v732
  %v735 = vadd.f32 %v729, %v734
  %736 = vrot.lane.b32.xlu0 %v700, 32
  %v737 = vpop.permute.xlu0 %736
  %v739 = vadd.f32 %v660, %v737
  %v740 = vxor.u32 %v739, 2147483648
  %v741 = vmul.f32 %v740, 1.442695
  %v742 = vpow.pop %v741
  %v743 = vadd.f32 %v742, 1.0
  %v744 = vrcp.pop %v743
  %v745 = vmul.f32 1.0, %v744
  %747 = vrot.lane.b32.xlu0 %v702, 32
  %v748 = vpop.permute.xlu0 %747
  %v750 = vadd.f32 %v660, %v748
  %v751 = vxor.u32 %v750, 2147483648
  %v752 = vmul.f32 %v751, 1.442695
  %v753 = vpow.pop %v752
  %v754 = vadd.f32 %v753, 1.0
  %v755 = vrcp.pop %v754
  %v756 = vmul.f32 1.0, %v755
  %757 = vrot.lane.b32.xlu0 %v702, 96
  %v758 = vpop.permute.xlu0 %757
  %v760 = vmul.f32 %v745, %v758
  %762 = vrot.lane.b32.xlu0 %v760, 64
  %v763 = vpop.permute.xlu0 %762
  %v765 = vadd.f32 %v660, %v763
  %v766 = vtanh.pop %v765
  %v767 = vsub.f32 1.0, %v756
  %769 = vrot.lane.b32.xlu0 %v766, 96
  %v770 = vpop.permute.xlu0 %769
  %v772 = vmul.f32 %v767, %v770
  %v773 = vmul.f32 %v756, %v655
  %v774 = vadd.f32 %v772, %v773
  %776 = vrot.lane.b32.xlu0 %v735, 96
  %v777 = vpop.permute.xlu0 %776
  %v779 = vsel %vm530, %v777, %v774
  %v780 = vadd.f32 %v656, %v779
  %s781 = scalar_lea.vmem [#allocation2], 24
  %v782 = vld [vmem:[%s781] sm:$0xff]
  %s783 = scalar_lea.vmem [#allocation3], 32
  %v784 = vld [vmem:[%s783] sm:$0xff]
  %v785 = vpack.c.bf16 %v779, %v779
  %v787 = vsel %vm416, %v785, 0
  %789 = vmatprep.subr.bf16.mxu0 0
  %790 = vmatpush1.bf16.msra.mxu0 0
  %791 = vmatprep.subr.bf16.mxu0 0
  %792 = vmatpush1.bf16.msra.mxu0 0
  %793 = vmatprep.subr.bf16.mxu0 0
  %794 = vmatpush1.bf16.msra.mxu0 0
  %795 = vmatprep.subr.bf16.mxu0 0
  %796 = vmatpush1.bf16.msra.mxu0 0
  %797 = vmatprep.subr.bf16.mxu0 %v407
  %798 = vmatpush1.bf16.msra.mxu0 %v406
  %799 = vmatprep.subr.bf16.mxu0 %v405
  %800 = vmatpush1.bf16.msra.mxu0 %v404
  %801 = vmatprep.subr.bf16.mxu0 %v403
  %802 = vmatpush1.bf16.msra.mxu0 %v402
  %803 = vmatprep.subr.bf16.mxu0 %v401
  %804 = vmatpush1.bf16.msra.mxu0 %v400
  %805 = vmatprep.subr.bf16.mxu0 0
  %806 = vmatpush2.bf16.msra.mxu0 0
  %807 = vmatprep.subr.bf16.mxu0 0
  %808 = vmatpush2.bf16.msra.mxu0 0
  %809 = vmatprep.subr.bf16.mxu0 0
  %810 = vmatpush2.bf16.msra.mxu0 0
  %811 = vmatprep.subr.bf16.mxu0 0
  %812 = vmatpush2.bf16.msra.mxu0 0
  %813 = vmatprep.subr.bf16.mxu0 0
  %814 = vmatpush2.bf16.msra.mxu0 0
  %815 = vmatprep.subr.bf16.mxu0 0
  %816 = vmatpush2.bf16.msra.mxu0 0
  %817 = vmatprep.subr.bf16.mxu0 0
  %818 = vmatpush2.bf16.msra.mxu0 0
  %819 = vmatprep.subr.bf16.mxu0 0
  %820 = vmatpush2.bf16.msra.mxu0 0
  %821 = vmatprep.mubr.bf16.mxu0 0
  %822 = vmatmul.mubr.bf16.gmra.mxu0 %v787
  %v823 = vpop.f32.mrf.mxu0
  %v824 = vadd.f32 %v366, %v823
  %v825 = vpop.f32.mrf.mxu0
  %v826 = vadd.f32 %v370, %v825
  %v827 = vpop.f32.mrf.mxu0
  %v828 = vpop.f32.mrf.mxu0
  %829 = vdwg.mxu0
  %v830 = vadd.f32 %v782, %v824
  %v831 = vxor.u32 %v830, 2147483648
  %v832 = vmul.f32 %v831, 1.442695
  %v833 = vpow.pop %v832
  %v834 = vadd.f32 %v833, 1.0
  %v835 = vrcp.pop %v834
  %v836 = vmul.f32 1.0, %v835
  %838 = vrot.lane.b32.xlu0 %v824, 64
  %v839 = vpop.permute.xlu0 %838
  %v841 = vmul.f32 %v836, %v839
  %843 = vrot.lane.b32.xlu0 %v841, 64
  %v844 = vpop.permute.xlu0 %843
  %v846 = vadd.f32 %v782, %v844
  %v847 = vtanh.pop %v846
  %v848 = vsub.f32 1.0, %v836
  %850 = vrot.lane.b32.xlu0 %v847, 96
  %v851 = vpop.permute.xlu0 %850
  %v853 = vmul.f32 %v848, %v851
  %855 = vrot.lane.b32.xlu0 %v779, 32
  %v856 = vpop.permute.xlu0 %855
  %v858 = vmul.f32 %v836, %v856
  %v859 = vadd.f32 %v853, %v858
  %860 = vrot.lane.b32.xlu0 %v824, 32
  %v861 = vpop.permute.xlu0 %860
  %v863 = vadd.f32 %v784, %v861
  %v864 = vxor.u32 %v863, 2147483648
  %v865 = vmul.f32 %v864, 1.442695
  %v866 = vpow.pop %v865
  %v867 = vadd.f32 %v866, 1.0
  %v868 = vrcp.pop %v867
  %v869 = vmul.f32 1.0, %v868
  %871 = vrot.lane.b32.xlu0 %v826, 32
  %v872 = vpop.permute.xlu0 %871
  %v874 = vadd.f32 %v784, %v872
  %v875 = vxor.u32 %v874, 2147483648
  %v876 = vmul.f32 %v875, 1.442695
  %v877 = vpow.pop %v876
  %v878 = vadd.f32 %v877, 1.0
  %v879 = vrcp.pop %v878
  %v880 = vmul.f32 1.0, %v879
  %881 = vrot.lane.b32.xlu0 %v826, 96
  %v882 = vpop.permute.xlu0 %881
  %v884 = vmul.f32 %v869, %v882
  %886 = vrot.lane.b32.xlu0 %v884, 64
  %v887 = vpop.permute.xlu0 %886
  %v889 = vadd.f32 %v784, %v887
  %v890 = vtanh.pop %v889
  %v891 = vsub.f32 1.0, %v880
  %893 = vrot.lane.b32.xlu0 %v890, 96
  %v894 = vpop.permute.xlu0 %893
  %v896 = vmul.f32 %v891, %v894
  %v897 = vmul.f32 %v880, %v779
  %v898 = vadd.f32 %v896, %v897
  %900 = vrot.lane.b32.xlu0 %v859, 96
  %v901 = vpop.permute.xlu0 %900
  %v903 = vsel %vm530, %v901, %v898
  %v904 = vadd.f32 %v780, %v903
  %s905 = scalar_lea.vmem [#allocation2], 32
  %v906 = vld [vmem:[%s905] sm:$0xff]
  %s907 = scalar_lea.vmem [#allocation3], 24
  %v908 = vld [vmem:[%s907] sm:$0xff]
  %v909 = vpack.c.bf16 %v903, %v903
  %v911 = vsel %vm416, %v909, 0
  %913 = vmatprep.subr.bf16.mxu0 0
  %914 = vmatpush1.bf16.msra.mxu0 0
  %915 = vmatprep.subr.bf16.mxu0 0
  %916 = vmatpush1.bf16.msra.mxu0 0
  %917 = vmatprep.subr.bf16.mxu0 0
  %918 = vmatpush1.bf16.msra.mxu0 0
  %919 = vmatprep.subr.bf16.mxu0 0
  %920 = vmatpush1.bf16.msra.mxu0 0
  %921 = vmatprep.subr.bf16.mxu0 %v407
  %922 = vmatpush1.bf16.msra.mxu0 %v406
  %923 = vmatprep.subr.bf16.mxu0 %v405
  %924 = vmatpush1.bf16.msra.mxu0 %v404
  %925 = vmatprep.subr.bf16.mxu0 %v403
  %926 = vmatpush1.bf16.msra.mxu0 %v402
  %927 = vmatprep.subr.bf16.mxu0 %v401
  %928 = vmatpush1.bf16.msra.mxu0 %v400
  %929 = vmatprep.subr.bf16.mxu0 0
  %930 = vmatpush2.bf16.msra.mxu0 0
  %931 = vmatprep.subr.bf16.mxu0 0
  %932 = vmatpush2.bf16.msra.mxu0 0
  %933 = vmatprep.subr.bf16.mxu0 0
  %934 = vmatpush2.bf16.msra.mxu0 0
  %935 = vmatprep.subr.bf16.mxu0 0
  %936 = vmatpush2.bf16.msra.mxu0 0
  %937 = vmatprep.subr.bf16.mxu0 0
  %938 = vmatpush2.bf16.msra.mxu0 0
  %939 = vmatprep.subr.bf16.mxu0 0
  %940 = vmatpush2.bf16.msra.mxu0 0
  %941 = vmatprep.subr.bf16.mxu0 0
  %942 = vmatpush2.bf16.msra.mxu0 0
  %943 = vmatprep.subr.bf16.mxu0 0
  %944 = vmatpush2.bf16.msra.mxu0 0
  %945 = vmatprep.mubr.bf16.mxu0 0
  %946 = vmatmul.mubr.bf16.gmra.mxu0 %v911
  %v947 = vpop.f32.mrf.mxu0
  %v948 = vadd.f32 %v366, %v947
  %v949 = vpop.f32.mrf.mxu0
  %v950 = vadd.f32 %v370, %v949
  %v951 = vpop.f32.mrf.mxu0
  %v952 = vpop.f32.mrf.mxu0
  %953 = vdwg.mxu0
  %v954 = vadd.f32 %v906, %v948
  %v955 = vxor.u32 %v954, 2147483648
  %v956 = vmul.f32 %v955, 1.442695
  %v957 = vpow.pop %v956
  %v958 = vadd.f32 %v957, 1.0
  %v959 = vrcp.pop %v958
  %v960 = vmul.f32 1.0, %v959
  %962 = vrot.lane.b32.xlu0 %v948, 64
  %v963 = vpop.permute.xlu0 %962
  %v965 = vmul.f32 %v960, %v963
  %967 = vrot.lane.b32.xlu0 %v965, 64
  %v968 = vpop.permute.xlu0 %967
  %v970 = vadd.f32 %v906, %v968
  %v971 = vtanh.pop %v970
  %v972 = vsub.f32 1.0, %v960
  %974 = vrot.lane.b32.xlu0 %v971, 96
  %v975 = vpop.permute.xlu0 %974
  %v977 = vmul.f32 %v972, %v975
  %979 = vrot.lane.b32.xlu0 %v903, 32
  %v980 = vpop.permute.xlu0 %979
  %v982 = vmul.f32 %v960, %v980
  %v983 = vadd.f32 %v977, %v982
  %984 = vrot.lane.b32.xlu0 %v948, 32
  %v985 = vpop.permute.xlu0 %984
  %v987 = vadd.f32 %v908, %v985
  %v988 = vxor.u32 %v987, 2147483648
  %v989 = vmul.f32 %v988, 1.442695
  %v990 = vpow.pop %v989
  %v991 = vadd.f32 %v990, 1.0
  %v992 = vrcp.pop %v991
  %v993 = vmul.f32 1.0, %v992
  %995 = vrot.lane.b32.xlu0 %v950, 32
  %v996 = vpop.permute.xlu0 %995
  %v998 = vadd.f32 %v908, %v996
  %v999 = vxor.u32 %v998, 2147483648
  %v1000 = vmul.f32 %v999, 1.442695
  %v1001 = vpow.pop %v1000
  %v1002 = vadd.f32 %v1001, 1.0
  %v1003 = vrcp.pop %v1002
  %v1004 = vmul.f32 1.0, %v1003
  %1005 = vrot.lane.b32.xlu0 %v950, 96
  %v1006 = vpop.permute.xlu0 %1005
  %v1008 = vmul.f32 %v993, %v1006
  %1010 = vrot.lane.b32.xlu0 %v1008, 64
  %v1011 = vpop.permute.xlu0 %1010
  %v1013 = vadd.f32 %v908, %v1011
  %v1014 = vtanh.pop %v1013
  %v1015 = vsub.f32 1.0, %v1004
  %1017 = vrot.lane.b32.xlu0 %v1014, 96
  %v1018 = vpop.permute.xlu0 %1017
  %v1020 = vmul.f32 %v1015, %v1018
  %v1021 = vmul.f32 %v1004, %v903
  %v1022 = vadd.f32 %v1020, %v1021
  %1024 = vrot.lane.b32.xlu0 %v983, 96
  %v1025 = vpop.permute.xlu0 %1024
  %v1027 = vsel %vm530, %v1025, %v1022
  %v1028 = vadd.f32 %v904, %v1027
  %s1029 = scalar_lea.vmem [#allocation2], 40
  %v1030 = vld [vmem:[%s1029] sm:$0xff]
  %s1031 = scalar_lea.vmem [#allocation3], 16
  %v1032 = vld [vmem:[%s1031] sm:$0xff]
  %v1033 = vpack.c.bf16 %v1027, %v1027
  %v1035 = vsel %vm416, %v1033, 0
  %1037 = vmatprep.subr.bf16.mxu0 0
  %1038 = vmatpush1.bf16.msra.mxu0 0
  %1039 = vmatprep.subr.bf16.mxu0 0
  %1040 = vmatpush1.bf16.msra.mxu0 0
  %1041 = vmatprep.subr.bf16.mxu0 0
  %1042 = vmatpush1.bf16.msra.mxu0 0
  %1043 = vmatprep.subr.bf16.mxu0 0
  %1044 = vmatpush1.bf16.msra.mxu0 0
  %1045 = vmatprep.subr.bf16.mxu0 %v407
  %1046 = vmatpush1.bf16.msra.mxu0 %v406
  %1047 = vmatprep.subr.bf16.mxu0 %v405
  %1048 = vmatpush1.bf16.msra.mxu0 %v404
  %1049 = vmatprep.subr.bf16.mxu0 %v403
  %1050 = vmatpush1.bf16.msra.mxu0 %v402
  %1051 = vmatprep.subr.bf16.mxu0 %v401
  %1052 = vmatpush1.bf16.msra.mxu0 %v400
  %1053 = vmatprep.subr.bf16.mxu0 0
  %1054 = vmatpush2.bf16.msra.mxu0 0
  %1055 = vmatprep.subr.bf16.mxu0 0
  %1056 = vmatpush2.bf16.msra.mxu0 0
  %1057 = vmatprep.subr.bf16.mxu0 0
  %1058 = vmatpush2.bf16.msra.mxu0 0
  %1059 = vmatprep.subr.bf16.mxu0 0
  %1060 = vmatpush2.bf16.msra.mxu0 0
  %1061 = vmatprep.subr.bf16.mxu0 0
  %1062 = vmatpush2.bf16.msra.mxu0 0
  %1063 = vmatprep.subr.bf16.mxu0 0
  %1064 = vmatpush2.bf16.msra.mxu0 0
  %1065 = vmatprep.subr.bf16.mxu0 0
  %1066 = vmatpush2.bf16.msra.mxu0 0
  %1067 = vmatprep.subr.bf16.mxu0 0
  %1068 = vmatpush2.bf16.msra.mxu0 0
  %1069 = vmatprep.mubr.bf16.mxu0 0
  %1070 = vmatmul.mubr.bf16.gmra.mxu0 %v1035
  %v1071 = vpop.f32.mrf.mxu0
  %v1072 = vadd.f32 %v366, %v1071
  %v1073 = vpop.f32.mrf.mxu0
  %v1074 = vadd.f32 %v370, %v1073
  %v1075 = vpop.f32.mrf.mxu0
  %v1076 = vpop.f32.mrf.mxu0
  %1077 = vdwg.mxu0
  %v1078 = vadd.f32 %v1030, %v1072
  %v1079 = vxor.u32 %v1078, 2147483648
  %v1080 = vmul.f32 %v1079, 1.442695
  %v1081 = vpow.pop %v1080
  %v1082 = vadd.f32 %v1081, 1.0
  %v1083 = vrcp.pop %v1082
  %v1084 = vmul.f32 1.0, %v1083
  %1086 = vrot.lane.b32.xlu0 %v1072, 64
  %v1087 = vpop.permute.xlu0 %1086
  %v1089 = vmul.f32 %v1084, %v1087
  %1091 = vrot.lane.b32.xlu0 %v1089, 64
  %v1092 = vpop.permute.xlu0 %1091
  %v1094 = vadd.f32 %v1030, %v1092
  %v1095 = vtanh.pop %v1094
  %v1096 = vsub.f32 1.0, %v1084
  %1098 = vrot.lane.b32.xlu0 %v1095, 96
  %v1099 = vpop.permute.xlu0 %1098
  %v1101 = vmul.f32 %v1096, %v1099
  %1103 = vrot.lane.b32.xlu0 %v1027, 32
  %v1104 = vpop.permute.xlu0 %1103
  %v1106 = vmul.f32 %v1084, %v1104
  %v1107 = vadd.f32 %v1101, %v1106
  %1108 = vrot.lane.b32.xlu0 %v1072, 32
  %v1109 = vpop.permute.xlu0 %1108
  %v1111 = vadd.f32 %v1032, %v1109
  %v1112 = vxor.u32 %v1111, 2147483648
  %v1113 = vmul.f32 %v1112, 1.442695
  %v1114 = vpow.pop %v1113
  %v1115 = vadd.f32 %v1114, 1.0
  %v1116 = vrcp.pop %v1115
  %v1117 = vmul.f32 1.0, %v1116
  %1119 = vrot.lane.b32.xlu0 %v1074, 32
  %v1120 = vpop.permute.xlu0 %1119
  %v1122 = vadd.f32 %v1032, %v1120
  %v1123 = vxor.u32 %v1122, 2147483648
  %v1124 = vmul.f32 %v1123, 1.442695
  %v1125 = vpow.pop %v1124
  %v1126 = vadd.f32 %v1125, 1.0
  %v1127 = vrcp.pop %v1126
  %v1128 = vmul.f32 1.0, %v1127
  %1129 = vrot.lane.b32.xlu0 %v1074, 96
  %v1130 = vpop.permute.xlu0 %1129
  %v1132 = vmul.f32 %v1117, %v1130
  %1134 = vrot.lane.b32.xlu0 %v1132, 64
  %v1135 = vpop.permute.xlu0 %1134
  %v1137 = vadd.f32 %v1032, %v1135
  %v1138 = vtanh.pop %v1137
  %v1139 = vsub.f32 1.0, %v1128
  %1141 = vrot.lane.b32.xlu0 %v1138, 96
  %v1142 = vpop.permute.xlu0 %1141
  %v1144 = vmul.f32 %v1139, %v1142
  %v1145 = vmul.f32 %v1128, %v1027
  %v1146 = vadd.f32 %v1144, %v1145
  %1148 = vrot.lane.b32.xlu0 %v1107, 96
  %v1149 = vpop.permute.xlu0 %1148
  %v1151 = vsel %vm530, %v1149, %v1146
  %v1152 = vadd.f32 %v1028, %v1151
  %s1153 = scalar_lea.vmem [#allocation2], 48
  %v1154 = vld [vmem:[%s1153] sm:$0xff]
  %s1155 = scalar_lea.vmem [#allocation3], 8
  %v1156 = vld [vmem:[%s1155] sm:$0xff]
  %v1157 = vpack.c.bf16 %v1151, %v1151
  %v1159 = vsel %vm416, %v1157, 0
  %1161 = vmatprep.subr.bf16.mxu0 0
  %1162 = vmatpush1.bf16.msra.mxu0 0
  %1163 = vmatprep.subr.bf16.mxu0 0
  %1164 = vmatpush1.bf16.msra.mxu0 0
  %1165 = vmatprep.subr.bf16.mxu0 0
  %1166 = vmatpush1.bf16.msra.mxu0 0
  %1167 = vmatprep.subr.bf16.mxu0 0
  %1168 = vmatpush1.bf16.msra.mxu0 0
  %1169 = vmatprep.subr.bf16.mxu0 %v407
  %1170 = vmatpush1.bf16.msra.mxu0 %v406
  %1171 = vmatprep.subr.bf16.mxu0 %v405
  %1172 = vmatpush1.bf16.msra.mxu0 %v404
  %1173 = vmatprep.subr.bf16.mxu0 %v403
  %1174 = vmatpush1.bf16.msra.mxu0 %v402
  %1175 = vmatprep.subr.bf16.mxu0 %v401
  %1176 = vmatpush1.bf16.msra.mxu0 %v400
  %1177 = vmatprep.subr.bf16.mxu0 0
  %1178 = vmatpush2.bf16.msra.mxu0 0
  %1179 = vmatprep.subr.bf16.mxu0 0
  %1180 = vmatpush2.bf16.msra.mxu0 0
  %1181 = vmatprep.subr.bf16.mxu0 0
  %1182 = vmatpush2.bf16.msra.mxu0 0
  %1183 = vmatprep.subr.bf16.mxu0 0
  %1184 = vmatpush2.bf16.msra.mxu0 0
  %1185 = vmatprep.subr.bf16.mxu0 0
  %1186 = vmatpush2.bf16.msra.mxu0 0
  %1187 = vmatprep.subr.bf16.mxu0 0
  %1188 = vmatpush2.bf16.msra.mxu0 0
  %1189 = vmatprep.subr.bf16.mxu0 0
  %1190 = vmatpush2.bf16.msra.mxu0 0
  %1191 = vmatprep.subr.bf16.mxu0 0
  %1192 = vmatpush2.bf16.msra.mxu0 0
  %1193 = vmatprep.mubr.bf16.mxu0 0
  %1194 = vmatmul.mubr.bf16.gmra.mxu0 %v1159
  %v1195 = vpop.f32.mrf.mxu0
  %v1196 = vadd.f32 %v366, %v1195
  %v1197 = vpop.f32.mrf.mxu0
  %v1198 = vadd.f32 %v370, %v1197
  %v1199 = vpop.f32.mrf.mxu0
  %v1200 = vpop.f32.mrf.mxu0
  %1201 = vdwg.mxu0
  %v1202 = vadd.f32 %v1154, %v1196
  %v1203 = vxor.u32 %v1202, 2147483648
  %v1204 = vmul.f32 %v1203, 1.442695
  %v1205 = vpow.pop %v1204
  %v1206 = vadd.f32 %v1205, 1.0
  %v1207 = vrcp.pop %v1206
  %v1208 = vmul.f32 1.0, %v1207
  %1210 = vrot.lane.b32.xlu0 %v1196, 64
  %v1211 = vpop.permute.xlu0 %1210
  %v1213 = vmul.f32 %v1208, %v1211
  %1215 = vrot.lane.b32.xlu0 %v1213, 64
  %v1216 = vpop.permute.xlu0 %1215
  %v1218 = vadd.f32 %v1154, %v1216
  %v1219 = vtanh.pop %v1218
  %v1220 = vsub.f32 1.0, %v1208
  %1222 = vrot.lane.b32.xlu0 %v1219, 96
  %v1223 = vpop.permute.xlu0 %1222
  %v1225 = vmul.f32 %v1220, %v1223
  %1227 = vrot.lane.b32.xlu0 %v1151, 32
  %v1228 = vpop.permute.xlu0 %1227
  %v1230 = vmul.f32 %v1208, %v1228
  %v1231 = vadd.f32 %v1225, %v1230
  %1232 = vrot.lane.b32.xlu0 %v1196, 32
  %v1233 = vpop.permute.xlu0 %1232
  %v1235 = vadd.f32 %v1156, %v1233
  %v1236 = vxor.u32 %v1235, 2147483648
  %v1237 = vmul.f32 %v1236, 1.442695
  %v1238 = vpow.pop %v1237
  %v1239 = vadd.f32 %v1238, 1.0
  %v1240 = vrcp.pop %v1239
  %v1241 = vmul.f32 1.0, %v1240
  %1243 = vrot.lane.b32.xlu0 %v1198, 32
  %v1244 = vpop.permute.xlu0 %1243
  %v1246 = vadd.f32 %v1156, %v1244
  %v1247 = vxor.u32 %v1246, 2147483648
  %v1248 = vmul.f32 %v1247, 1.442695
  %v1249 = vpow.pop %v1248
  %v1250 = vadd.f32 %v1249, 1.0
  %v1251 = vrcp.pop %v1250
  %v1252 = vmul.f32 1.0, %v1251
  %1253 = vrot.lane.b32.xlu0 %v1198, 96
  %v1254 = vpop.permute.xlu0 %1253
  %v1256 = vmul.f32 %v1241, %v1254
  %1258 = vrot.lane.b32.xlu0 %v1256, 64
  %v1259 = vpop.permute.xlu0 %1258
  %v1261 = vadd.f32 %v1156, %v1259
  %v1262 = vtanh.pop %v1261
  %v1263 = vsub.f32 1.0, %v1252
  %1265 = vrot.lane.b32.xlu0 %v1262, 96
  %v1266 = vpop.permute.xlu0 %1265
  %v1268 = vmul.f32 %v1263, %v1266
  %v1269 = vmul.f32 %v1252, %v1151
  %v1270 = vadd.f32 %v1268, %v1269
  %1272 = vrot.lane.b32.xlu0 %v1231, 96
  %v1273 = vpop.permute.xlu0 %1272
  %v1275 = vsel %vm530, %v1273, %v1270
  %v1276 = vadd.f32 %v1152, %v1275
  %s1277 = scalar_lea.vmem [#allocation2], 56
  %v1278 = vld [vmem:[%s1277] sm:$0xff]
  %v1279 = vld [vmem:[#allocation3] sm:$0xff]
  %v1280 = vpack.c.bf16 %v1275, %v1275
  %v1282 = vsel %vm416, %v1280, 0
  %1284 = vmatprep.subr.bf16.mxu0 0
  %1285 = vmatpush1.bf16.msra.mxu0 0
  %1286 = vmatprep.subr.bf16.mxu0 0
  %1287 = vmatpush1.bf16.msra.mxu0 0
  %1288 = vmatprep.subr.bf16.mxu0 0
  %1289 = vmatpush1.bf16.msra.mxu0 0
  %1290 = vmatprep.subr.bf16.mxu0 0
  %1291 = vmatpush1.bf16.msra.mxu0 0
  %1292 = vmatprep.subr.bf16.mxu0 %v407
  %1293 = vmatpush1.bf16.msra.mxu0 %v406
  %1294 = vmatprep.subr.bf16.mxu0 %v405
  %1295 = vmatpush1.bf16.msra.mxu0 %v404
  %1296 = vmatprep.subr.bf16.mxu0 %v403
  %1297 = vmatpush1.bf16.msra.mxu0 %v402
  %1298 = vmatprep.subr.bf16.mxu0 %v401
  %1299 = vmatpush1.bf16.msra.mxu0 %v400
  %1300 = vmatprep.subr.bf16.mxu0 0
  %1301 = vmatpush2.bf16.msra.mxu0 0
  %1302 = vmatprep.subr.bf16.mxu0 0
  %1303 = vmatpush2.bf16.msra.mxu0 0
  %1304 = vmatprep.subr.bf16.mxu0 0
  %1305 = vmatpush2.bf16.msra.mxu0 0
  %1306 = vmatprep.subr.bf16.mxu0 0
  %1307 = vmatpush2.bf16.msra.mxu0 0
  %1308 = vmatprep.subr.bf16.mxu0 0
  %1309 = vmatpush2.bf16.msra.mxu0 0
  %1310 = vmatprep.subr.bf16.mxu0 0
  %1311 = vmatpush2.bf16.msra.mxu0 0
  %1312 = vmatprep.subr.bf16.mxu0 0
  %1313 = vmatpush2.bf16.msra.mxu0 0
  %1314 = vmatprep.subr.bf16.mxu0 0
  %1315 = vmatpush2.bf16.msra.mxu0 0
  %1316 = vmatprep.mubr.bf16.mxu0 0
  %1317 = vmatmul.mubr.bf16.gmra.mxu0 %v1282
  %v1318 = vpop.f32.mrf.mxu0
  %v1319 = vadd.f32 %v366, %v1318
  %v1320 = vpop.f32.mrf.mxu0
  %v1321 = vadd.f32 %v370, %v1320
  %v1322 = vpop.f32.mrf.mxu0
  %v1323 = vpop.f32.mrf.mxu0
  %1324 = vdwg.mxu0
  %v1325 = vadd.f32 %v1278, %v1319
  %v1326 = vxor.u32 %v1325, 2147483648
  %v1327 = vmul.f32 %v1326, 1.442695
  %v1328 = vpow.pop %v1327
  %v1329 = vadd.f32 %v1328, 1.0
  %v1330 = vrcp.pop %v1329
  %v1331 = vmul.f32 1.0, %v1330
  %1333 = vrot.lane.b32.xlu0 %v1319, 64
  %v1334 = vpop.permute.xlu0 %1333
  %v1336 = vmul.f32 %v1331, %v1334
  %1338 = vrot.lane.b32.xlu0 %v1336, 64
  %v1339 = vpop.permute.xlu0 %1338
  %v1341 = vadd.f32 %v1278, %v1339
  %v1342 = vtanh.pop %v1341
  %v1343 = vsub.f32 1.0, %v1331
  %1345 = vrot.lane.b32.xlu0 %v1342, 96
  %v1346 = vpop.permute.xlu0 %1345
  %v1348 = vmul.f32 %v1343, %v1346
  %1350 = vrot.lane.b32.xlu0 %v1275, 32
  %v1351 = vpop.permute.xlu0 %1350
  %v1353 = vmul.f32 %v1331, %v1351
  %v1354 = vadd.f32 %v1348, %v1353
  %1355 = vrot.lane.b32.xlu0 %v1319, 32
  %v1356 = vpop.permute.xlu0 %1355
  %v1358 = vadd.f32 %v1279, %v1356
  %v1359 = vxor.u32 %v1358, 2147483648
  %v1360 = vmul.f32 %v1359, 1.442695
  %v1361 = vpow.pop %v1360
  %v1362 = vadd.f32 %v1361, 1.0
  %v1363 = vrcp.pop %v1362
  %v1364 = vmul.f32 1.0, %v1363
  %1366 = vrot.lane.b32.xlu0 %v1321, 32
  %v1367 = vpop.permute.xlu0 %1366
  %v1369 = vadd.f32 %v1279, %v1367
  %v1370 = vxor.u32 %v1369, 2147483648
  %v1371 = vmul.f32 %v1370, 1.442695
  %v1372 = vpow.pop %v1371
  %v1373 = vadd.f32 %v1372, 1.0
  %v1374 = vrcp.pop %v1373
  %v1375 = vmul.f32 1.0, %v1374
  %1376 = vrot.lane.b32.xlu0 %v1321, 96
  %v1377 = vpop.permute.xlu0 %1376
  %v1379 = vmul.f32 %v1364, %v1377
  %1381 = vrot.lane.b32.xlu0 %v1379, 64
  %v1382 = vpop.permute.xlu0 %1381
  %v1384 = vadd.f32 %v1279, %v1382
  %v1385 = vtanh.pop %v1384
  %v1386 = vsub.f32 1.0, %v1375
  %1388 = vrot.lane.b32.xlu0 %v1385, 96
  %v1389 = vpop.permute.xlu0 %1388
  %v1391 = vmul.f32 %v1386, %v1389
  %v1392 = vmul.f32 %v1375, %v1275
  %v1393 = vadd.f32 %v1391, %v1392
  %1395 = vrot.lane.b32.xlu0 %v1354, 96
  %v1396 = vpop.permute.xlu0 %1395
  %v1398 = vsel %vm530, %v1396, %v1393
  %v1399 = vadd.f32 %v1276, %v1398
  %v1400 = vld [vmem:[%s9] sm:$0xff]
  %v1401 = vld [vmem:[%s9 + $0x8] sm:$0xff]
  %v1402 = vld [vmem:[%s9 + $0x10] sm:$0xff]
  %v1403 = vld [vmem:[%s9 + $0x18] sm:$0xff]
  %v1404 = vld [vmem:[%s9 + $0x20] sm:$0xff]
  %v1405 = vld [vmem:[%s9 + $0x28] sm:$0xff]
  %v1406 = vld [vmem:[%s9 + $0x30] sm:$0xff]
  %v1407 = vld [vmem:[%s9 + $0x38] sm:$0xff]
  %v1408 = vld [vmem:[%s10] sm:$0x1]
  %v1409 = vmul.f32 %v1408, 8.0
  %v1411 = vlaneseq
  %v1412 = vshrl.u32 %v1411, 7
  %v1413 = vsub.s32 0, %v1412
  %v1414 = vrot.slane %v1409, %v1413
  %v1417 = vsel %vm416, %v1399, 0
  %1419 = vmatprep.subr.mxu0 0.0
  %1420 = vmatpush1.msra.mxu0 0.0
  %1421 = vmatprep.subr.mxu0 0.0
  %1422 = vmatpush1.msra.mxu0 0.0
  %1423 = vmatprep.subr.mxu0 0.0
  %1424 = vmatpush1.msra.mxu0 0.0
  %1425 = vmatprep.subr.mxu0 0.0
  %1426 = vmatpush1.msra.mxu0 0.0
  %1427 = vmatprep.subr.mxu0 0.0
  %1428 = vmatpush1.msra.mxu0 0.0
  %1429 = vmatprep.subr.mxu0 0.0
  %1430 = vmatpush1.msra.mxu0 0.0
  %1431 = vmatprep.subr.mxu0 0.0
  %1432 = vmatpush1.msra.mxu0 0.0
  %1433 = vmatprep.subr.mxu0 0.0
  %1434 = vmatpush1.msra.mxu0 0.0
  %1435 = vmatprep.subr.mxu0 0.0
  %1436 = vmatpush1.msra.mxu0 %v1407
  %1437 = vmatprep.subr.mxu0 0.0
  %1438 = vmatpush1.msra.mxu0 %v1406
  %1439 = vmatprep.subr.mxu0 0.0
  %1440 = vmatpush1.msra.mxu0 %v1405
  %1441 = vmatprep.subr.mxu0 0.0
  %1442 = vmatpush1.msra.mxu0 %v1404
  %1443 = vmatprep.subr.mxu0 0.0
  %1444 = vmatpush1.msra.mxu0 %v1403
  %1445 = vmatprep.subr.mxu0 0.0
  %1446 = vmatpush1.msra.mxu0 %v1402
  %1447 = vmatprep.subr.mxu0 0.0
  %1448 = vmatpush1.msra.mxu0 %v1401
  %1449 = vmatprep.subr.mxu0 0.0
  %1450 = vmatpush1.msra.mxu0 %v1400
  %1451 = vmatprep.subr.mxu0 0.0
  %1452 = vmatpush2.msra.mxu0 0.0
  %1453 = vmatprep.subr.mxu0 0.0
  %1454 = vmatpush2.msra.mxu0 0.0
  %1455 = vmatprep.subr.mxu0 0.0
  %1456 = vmatpush2.msra.mxu0 0.0
  %1457 = vmatprep.subr.mxu0 0.0
  %1458 = vmatpush2.msra.mxu0 0.0
  %1459 = vmatprep.subr.mxu0 0.0
  %1460 = vmatpush2.msra.mxu0 0.0
  %1461 = vmatprep.subr.mxu0 0.0
  %1462 = vmatpush2.msra.mxu0 0.0
  %1463 = vmatprep.subr.mxu0 0.0
  %1464 = vmatpush2.msra.mxu0 0.0
  %1465 = vmatprep.subr.mxu0 0.0
  %1466 = vmatpush2.msra.mxu0 0.0
  %1467 = vmatprep.subr.mxu0 0.0
  %1468 = vmatpush2.msra.mxu0 0.0
  %1469 = vmatprep.subr.mxu0 0.0
  %1470 = vmatpush2.msra.mxu0 0.0
  %1471 = vmatprep.subr.mxu0 0.0
  %1472 = vmatpush2.msra.mxu0 0.0
  %1473 = vmatprep.subr.mxu0 0.0
  %1474 = vmatpush2.msra.mxu0 0.0
  %1475 = vmatprep.subr.mxu0 0.0
  %1476 = vmatpush2.msra.mxu0 0.0
  %1477 = vmatprep.subr.mxu0 0.0
  %1478 = vmatpush2.msra.mxu0 0.0
  %1479 = vmatprep.subr.mxu0 0.0
  %1480 = vmatpush2.msra.mxu0 0.0
  %1481 = vmatprep.subr.mxu0 0.0
  %1482 = vmatpush2.msra.mxu0 0.0
  %1483 = vmatprep.mubr.f32.mxu0 0.0
  %1484 = vmatmul.mubr.f32.gmra.mxu0 %v1417
  %v1485 = vpop.f32.mrf.mxu0
  %v1486 = vadd.f32 %v1414, %v1485
  %v1487 = vpop.f32.mrf.mxu0
  %1488 = vdwg.mxu0
  %vm1489 = vcmask 80896
  %1490 = vst.msk [vmem:[%s11] sm:$0xff] %vm1489, %v1486
  // Predicated region
  $region46: #{bigru_forward.1} parent=0 // pred_check
    _
  $region47: #{bigru_forward.1} parent=0 // pred_check_branch
    %1492 = sbr.rel (0) target = $region49
  $region48: #{bigru_forward.1} parent=0 // pred_region
    _
  $region49: #{bigru_forward.1} parent=0 // pred_fallthru
    _
  // Predicated region
  $region50: #{bigru_forward.1} parent=0 // pred_check
    _
  $region51: #{bigru_forward.1} parent=0 // pred_check_branch
    %1494 = sbr.rel (0) target = $region53
  $region52: #{bigru_forward.1} parent=0 // pred_region
    _
  $region53: #{bigru_forward.1} parent=0 // pred_fallthru
    _

</llo_original>
